<compile_context>
chip_gen: v6e
topology: v6e:2x2x1
jax: 0.10.0
libtpu: 0.0.40
codegen_flags: <defaults>
</compile_context>

<pallas_src>
import numpy as np
import jax
import jax.numpy as jnp
from jax.experimental import pallas as pl
from jax.experimental.pallas import tpu as pltpu


# ---- offsets into the packed SMEM scalar table -------------------------------
_K2_OFF = 0          # k2 (11, 3) row-major:  scal[3*i + dj]
_K3_OFF = 33         # k3 (3, 3)  row-major:  scal[33 + 3*di + dj]
_BC1 = 42            # conv1 bias
_BC2 = 43            # conv2 bias
_BC3 = 44            # conv3 bias
_B2 = 45             # fc2 bias
_NSCAL = 46


def hingston_kernel(x_ref, k1_ref, wfc_ref, w1cp_ref, scal_ref, out_ref):
    """One batch tile of TB boards; batch lives on the lane (minor) axis.

    x_ref    : (11, 11, TB) VMEM   boards, laid out [h, w, b]
    k1_ref   : (3, 11, 1)   VMEM   conv1 kernel rows (sublane-varying)
    wfc_ref  : (10, 20)     VMEM   [ W1[:,0:9] | W1[:,9:18] | b1 | W2^T ]
    w1cp_ref : (9, 10, 9)   VMEM   w1cp[i, o, j] = W1[o, 18 + 9*i + j]
    scal_ref : (46,)        SMEM   k2 flat, k3 flat, conv biases, fc2 bias
    out_ref  : (1, TB)      VMEM   per-board scalar output (lane-dense)
    """
    x = x_ref[...]                                    # (11, 11, TB) f32
    tb = x.shape[-1]

    # ---- conv1 (3x11 kernel, valid) -> c1: (9, TB) ---------------------------
    # acc1[i, w, b] = sum_di x[i+di, w, b] * k1[di, w]   (VPU MACs)
    k1b = jnp.broadcast_to(k1_ref[...], (3, 11, tb))  # hoisted lane broadcast
    acc1 = x[0:9] * k1b[0]
    acc1 = acc1 + x[1:10] * k1b[1]
    acc1 = acc1 + x[2:11] * k1b[2]
    c1 = jnp.sum(acc1, axis=1) + scal_ref[_BC1]       # reduce over w -> (9, TB)

    # ---- conv2 (11x3 kernel, valid) -> c2: (9, TB) ---------------------------
    # c2[j, b] = sum_{i, dj} x[i, j+dj, b] * k2[i, dj]   (scalar MACs on VPU)
    c2 = jnp.zeros((9, tb), jnp.float32) + scal_ref[_BC2]
    for i in range(11):
        for dj in range(3):
            c2 = c2 + x[i, dj:dj + 9, :] * scal_ref[_K2_OFF + 3 * i + dj]

    # ---- conv3 (3x3 kernel, valid) -> c3: (9, 9, TB) -------------------------
    c3 = jnp.zeros((9, 9, tb), jnp.float32) + scal_ref[_BC3]
    for di in range(3):
        for dj in range(3):
            c3 = c3 + x[di:di + 9, dj:dj + 9, :] * scal_ref[_K3_OFF + 3 * di + dj]

    # ---- fc1: h = W1 @ [c1; c2; vec(c3)] + b1  -> (10, TB) -------------------
    wfc = wfc_ref[...]
    w1a = wfc[:, 0:9]          # (10, 9)  conv1-feature columns of W1
    w1b = wfc[:, 9:18]         # (10, 9)  conv2-feature columns of W1
    b1 = wfc[:, 18:19]         # (10, 1)
    w2 = wfc[:, 19:20]         # (10, 1)  fc2 weight as a column

    h = b1 + jnp.dot(w1a, c1, preferred_element_type=jnp.float32)
    h = h + jnp.dot(w1b, c2, preferred_element_type=jnp.float32)
    # single batched contraction over all 81 conv3 features (independent MXU
    # passes + one reduction instead of a 9-step dependent accumulation chain)
    t = jnp.einsum('ioj,ijb->iob', w1cp_ref[...], c3,
                   preferred_element_type=jnp.float32)     # (9, 10, TB)
    h = h + jnp.sum(t, axis=0)                             # (10, TB)

    # ---- fc2 on the VPU (M=1 matvec has no business on the MXU) --------------
    out_ref[...] = jnp.sum(w2 * h, axis=0, keepdims=True) + scal_ref[_B2]


def init_params(key):
    ks = jax.random.split(key, 10)
    return {
        "k1": 0.1 * jax.random.normal(ks[0], (3, 11), jnp.float32),
        "b_c1": 0.1 * jax.random.normal(ks[1], (), jnp.float32),
        "k2": 0.1 * jax.random.normal(ks[2], (11, 3), jnp.float32),
        "b_c2": 0.1 * jax.random.normal(ks[3], (), jnp.float32),
        "k3": 0.1 * jax.random.normal(ks[4], (3, 3), jnp.float32),
        "b_c3": 0.1 * jax.random.normal(ks[5], (), jnp.float32),
        "W1": 0.1 * jax.random.normal(ks[6], (10, 99), jnp.float32),
        "b1": 0.1 * jax.random.normal(ks[7], (10,), jnp.float32),
        "W2": 0.1 * jax.random.normal(ks[8], (1, 10), jnp.float32),
        "b2": 0.1 * jax.random.normal(ks[9], (1,), jnp.float32),
    }


def hingston_forward(x_boards, p, *, block_b=128):
    """x_boards: (B, 1, 11, 11) NCHW (or (B, 11, 11)).  Returns (B, 1) float32,
    i.e. the torch module's (1,)-shaped output stacked over the batch."""
    x = jnp.asarray(x_boards, jnp.float32).reshape(-1, 11, 11)
    batch = x.shape[0]
    bp = ((batch + block_b - 1) // block_b) * block_b
    if bp != batch:
        x = jnp.pad(x, ((0, bp - batch), (0, 0), (0, 0)))
    # host-side layout plumbing: batch onto the lane axis
    xl = jnp.transpose(x, (1, 2, 0))                                   # (11, 11, Bp)

    # ---- pack parameters into 4 small operands (host-side glue only) --------
    w1 = jnp.asarray(p["W1"], jnp.float32)                             # (10, 99)
    k1p = jnp.asarray(p["k1"], jnp.float32).reshape(3, 11, 1)
    wfc = jnp.concatenate(
        [w1[:, 0:18],
         jnp.asarray(p["b1"], jnp.float32).reshape(10, 1),
         jnp.asarray(p["W2"], jnp.float32).reshape(10, 1)], axis=1)    # (10, 20)
    w1cp = jnp.transpose(w1[:, 18:99].reshape(10, 9, 9), (1, 0, 2))    # (9, 10, 9)
    scal = jnp.concatenate(
        [jnp.asarray(p["k2"], jnp.float32).reshape(-1),
         jnp.asarray(p["k3"], jnp.float32).reshape(-1),
         jnp.stack([p["b_c1"], p["b_c2"], p["b_c3"]]).astype(jnp.float32),
         jnp.asarray(p["b2"], jnp.float32).reshape(-1)])               # (46,)

    vmem = pltpu.MemorySpace.VMEM
    out = pl.pallas_call(
        hingston_kernel,
        out_shape=jax.ShapeDtypeStruct((1, bp), jnp.float32),
        grid=(bp // block_b,),
        in_specs=[
            pl.BlockSpec((11, 11, block_b), lambda b: (0, 0, b), memory_space=vmem),
            pl.BlockSpec((3, 11, 1), lambda b: (0, 0, 0), memory_space=vmem),
            pl.BlockSpec((10, 20), lambda b: (0, 0), memory_space=vmem),
            pl.BlockSpec((9, 10, 9), lambda b: (0, 0, 0), memory_space=vmem),
            pl.BlockSpec((_NSCAL,), lambda b: (0,),
                         memory_space=pltpu.MemorySpace.SMEM),
        ],
        out_specs=pl.BlockSpec((1, block_b), lambda b: (0, b), memory_space=vmem),
        compiler_params=pltpu.CompilerParams(
            dimension_semantics=("parallel",)),
    )(xl, k1p, wfc, w1cp, scal)

    return out[0, :batch].reshape(batch, 1)


def reference_numpy(x_boards, p):
    """Vectorized numpy re-implementation of the torch forward pass."""
    x = np.asarray(x_boards, np.float32).reshape(-1, 11, 11)
    k1 = np.asarray(p["k1"]); k2 = np.asarray(p["k2"]); k3 = np.asarray(p["k3"])
    b = x.shape[0]
    c1 = np.zeros((b, 9), np.float32)
    for di in range(3):
        c1 += np.einsum('bhw,w->bh', x[:, di:di + 9, :], k1[di])
    c1 += float(p["b_c1"])
    c2 = np.zeros((b, 9), np.float32)
    for dj in range(3):
        c2 += np.einsum('bij,i->bj', x[:, :, dj:dj + 9], k2[:, dj])
    c2 += float(p["b_c2"])
    c3 = np.zeros((b, 9, 9), np.float32)
    for di in range(3):
        for dj in range(3):
            c3 += x[:, di:di + 9, dj:dj + 9] * k3[di, dj]
    c3 += float(p["b_c3"])
    feat = np.concatenate([c1, c2, c3.reshape(b, 81)], axis=1)          # (B, 99)
    h = feat @ np.asarray(p["W1"]).T + np.asarray(p["b1"])              # (B, 10)
    return h @ np.asarray(p["W2"]).T + np.asarray(p["b2"])              # (B, 1)


if __name__ == "__main__":
    key = jax.random.PRNGKey(0)
    k_x, k_p = jax.random.split(key)
    B = 256                                                  # two lane-dense tiles
    x_boards = jax.random.normal(k_x, (B, 1, 11, 11), jnp.float32)   # NCHW, C=1
    params = init_params(k_p)

    out = jax.block_until_ready(hingston_forward(x_boards, params))
    ref = reference_numpy(x_boards, params)

    if not np.allclose(np.asarray(out), ref, rtol=1e-4, atol=1e-4):
        err = float(np.max(np.abs(np.asarray(out) - ref)))
        raise AssertionError(f"mismatch: max abs err = {err}")
    print("KERNEL_OK")
</pallas_src>

<mosaic_0001>
module attributes {stable_mosaic.version = 11 : i64} {
  func.func @hingston_kernel(%arg0: i32, %arg1: memref<11x11x128xf32, #tpu.memory_space<vmem>>, %arg2: memref<3x11x1xf32, #tpu.memory_space<vmem>>, %arg3: memref<10x20xf32, #tpu.memory_space<vmem>>, %arg4: memref<9x10x9xf32, #tpu.memory_space<vmem>>, %arg5: memref<46xf32, #tpu.memory_space<smem>>, %arg6: memref<1x128xf32, #tpu.memory_space<vmem>>) attributes {dimension_semantics = [#tpu.dimension_semantics<parallel>], iteration_bounds = array<i64: 2>, scalar_prefetch = 0 : i64, scratch_operands = 0 : i64, tpu.core_type = #tpu.core_type<tc>, window_params = [{transform_indices = @transform_0, window_bounds = array<i64: 11, 11, 128>}, {pipeline_mode = #tpu.pipeline_mode<synchronous>, transform_indices = @transform_1, window_bounds = array<i64: 3, 11, 1>}, {pipeline_mode = #tpu.pipeline_mode<synchronous>, transform_indices = @transform_2, window_bounds = array<i64: 10, 20>}, {pipeline_mode = #tpu.pipeline_mode<synchronous>, transform_indices = @transform_3, window_bounds = array<i64: 9, 10, 9>}, {transform_indices = @transform_4, window_bounds = array<i64: 46>}, {transform_indices = @transform_5, window_bounds = array<i64: 1, 128>}]} {
    %c0 = arith.constant 0 : index
    %c0_0 = arith.constant 0 : index
    %c0_1 = arith.constant 0 : index
    %0 = vector.load %arg1[%c0, %c0_0, %c0_1] : memref<11x11x128xf32, #tpu.memory_space<vmem>>, vector<11x11x128xf32>
    %c0_2 = arith.constant 0 : index
    %c0_3 = arith.constant 0 : index
    %c0_4 = arith.constant 0 : index
    %1 = vector.load %arg2[%c0_2, %c0_3, %c0_4] : memref<3x11x1xf32, #tpu.memory_space<vmem>>, vector<3x11x1xf32>
    %2 = vector.shape_cast %1 : vector<3x11x1xf32> to vector<3x11x1xf32>
    %3 = vector.broadcast %2 : vector<3x11x1xf32> to vector<3x11x128xf32>
    %4 = vector.extract_strided_slice %0 {offsets = [0, 0, 0], sizes = [9, 11, 128], strides = [1, 1, 1]} : vector<11x11x128xf32> to vector<9x11x128xf32>
    %5 = vector.extract_strided_slice %3 {offsets = [0, 0, 0], sizes = [1, 11, 128], strides = [1, 1, 1]} : vector<3x11x128xf32> to vector<1x11x128xf32>
    %6 = vector.shape_cast %5 : vector<1x11x128xf32> to vector<11x128xf32>
    %7 = vector.shape_cast %6 : vector<11x128xf32> to vector<1x11x128xf32>
    %8 = vector.broadcast %7 : vector<1x11x128xf32> to vector<9x11x128xf32>
    %9 = arith.mulf %4, %8 : vector<9x11x128xf32>
    %10 = vector.extract_strided_slice %0 {offsets = [1, 0, 0], sizes = [9, 11, 128], strides = [1, 1, 1]} : vector<11x11x128xf32> to vector<9x11x128xf32>
    %11 = vector.extract_strided_slice %3 {offsets = [1, 0, 0], sizes = [1, 11, 128], strides = [1, 1, 1]} : vector<3x11x128xf32> to vector<1x11x128xf32>
    %12 = vector.shape_cast %11 : vector<1x11x128xf32> to vector<11x128xf32>
    %13 = vector.shape_cast %12 : vector<11x128xf32> to vector<1x11x128xf32>
    %14 = vector.broadcast %13 : vector<1x11x128xf32> to vector<9x11x128xf32>
    %15 = arith.mulf %10, %14 : vector<9x11x128xf32>
    %16 = arith.addf %9, %15 : vector<9x11x128xf32>
    %17 = vector.extract_strided_slice %0 {offsets = [2, 0, 0], sizes = [9, 11, 128], strides = [1, 1, 1]} : vector<11x11x128xf32> to vector<9x11x128xf32>
    %18 = vector.extract_strided_slice %3 {offsets = [2, 0, 0], sizes = [1, 11, 128], strides = [1, 1, 1]} : vector<3x11x128xf32> to vector<1x11x128xf32>
    %19 = vector.shape_cast %18 : vector<1x11x128xf32> to vector<11x128xf32>
    %20 = vector.shape_cast %19 : vector<11x128xf32> to vector<1x11x128xf32>
    %21 = vector.broadcast %20 : vector<1x11x128xf32> to vector<9x11x128xf32>
    %22 = arith.mulf %17, %21 : vector<9x11x128xf32>
    %23 = arith.addf %16, %22 : vector<9x11x128xf32>
    %cst = arith.constant dense<0.000000e+00> : vector<9x128xf32>
    %24 = vector.multi_reduction <add>, %23, %cst [1] : vector<9x11x128xf32> to vector<9x128xf32>
    %c42 = arith.constant 42 : index
    %25 = memref.load %arg5[%c42] : memref<46xf32, #tpu.memory_space<smem>>
    %26 = vector.broadcast %25 : f32 to vector<9x128xf32>
    %27 = arith.addf %24, %26 : vector<9x128xf32>
    %cst_5 = arith.constant 0.000000e+00 : f32
    %28 = vector.broadcast %cst_5 : f32 to vector<9x128xf32>
    %c43 = arith.constant 43 : index
    %29 = memref.load %arg5[%c43] : memref<46xf32, #tpu.memory_space<smem>>
    %30 = vector.broadcast %29 : f32 to vector<9x128xf32>
    %31 = arith.addf %28, %30 : vector<9x128xf32>
    %32 = vector.extract_strided_slice %0 {offsets = [0, 0, 0], sizes = [1, 9, 128], strides = [1, 1, 1]} : vector<11x11x128xf32> to vector<1x9x128xf32>
    %33 = vector.shape_cast %32 : vector<1x9x128xf32> to vector<9x128xf32>
    %c0_6 = arith.constant 0 : index
    %34 = memref.load %arg5[%c0_6] : memref<46xf32, #tpu.memory_space<smem>>
    %35 = vector.broadcast %34 : f32 to vector<9x128xf32>
    %36 = arith.mulf %33, %35 : vector<9x128xf32>
    %37 = arith.addf %31, %36 : vector<9x128xf32>
    %38 = vector.extract_strided_slice %0 {offsets = [0, 1, 0], sizes = [1, 9, 128], strides = [1, 1, 1]} : vector<11x11x128xf32> to vector<1x9x128xf32>
    %39 = vector.shape_cast %38 : vector<1x9x128xf32> to vector<9x128xf32>
    %c1 = arith.constant 1 : index
    %40 = memref.load %arg5[%c1] : memref<46xf32, #tpu.memory_space<smem>>
    %41 = vector.broadcast %40 : f32 to vector<9x128xf32>
    %42 = arith.mulf %39, %41 : vector<9x128xf32>
    %43 = arith.addf %37, %42 : vector<9x128xf32>
    %44 = vector.extract_strided_slice %0 {offsets = [0, 2, 0], sizes = [1, 9, 128], strides = [1, 1, 1]} : vector<11x11x128xf32> to vector<1x9x128xf32>
    %45 = vector.shape_cast %44 : vector<1x9x128xf32> to vector<9x128xf32>
    %c2 = arith.constant 2 : index
    %46 = memref.load %arg5[%c2] : memref<46xf32, #tpu.memory_space<smem>>
    %47 = vector.broadcast %46 : f32 to vector<9x128xf32>
    %48 = arith.mulf %45, %47 : vector<9x128xf32>
    %49 = arith.addf %43, %48 : vector<9x128xf32>
    %50 = vector.extract_strided_slice %0 {offsets = [1, 0, 0], sizes = [1, 9, 128], strides = [1, 1, 1]} : vector<11x11x128xf32> to vector<1x9x128xf32>
    %51 = vector.shape_cast %50 : vector<1x9x128xf32> to vector<9x128xf32>
    %c3 = arith.constant 3 : index
    %52 = memref.load %arg5[%c3] : memref<46xf32, #tpu.memory_space<smem>>
    %53 = vector.broadcast %52 : f32 to vector<9x128xf32>
    %54 = arith.mulf %51, %53 : vector<9x128xf32>
    %55 = arith.addf %49, %54 : vector<9x128xf32>
    %56 = vector.extract_strided_slice %0 {offsets = [1, 1, 0], sizes = [1, 9, 128], strides = [1, 1, 1]} : vector<11x11x128xf32> to vector<1x9x128xf32>
    %57 = vector.shape_cast %56 : vector<1x9x128xf32> to vector<9x128xf32>
    %c4 = arith.constant 4 : index
    %58 = memref.load %arg5[%c4] : memref<46xf32, #tpu.memory_space<smem>>
    %59 = vector.broadcast %58 : f32 to vector<9x128xf32>
    %60 = arith.mulf %57, %59 : vector<9x128xf32>
    %61 = arith.addf %55, %60 : vector<9x128xf32>
    %62 = vector.extract_strided_slice %0 {offsets = [1, 2, 0], sizes = [1, 9, 128], strides = [1, 1, 1]} : vector<11x11x128xf32> to vector<1x9x128xf32>
    %63 = vector.shape_cast %62 : vector<1x9x128xf32> to vector<9x128xf32>
    %c5 = arith.constant 5 : index
    %64 = memref.load %arg5[%c5] : memref<46xf32, #tpu.memory_space<smem>>
    %65 = vector.broadcast %64 : f32 to vector<9x128xf32>
    %66 = arith.mulf %63, %65 : vector<9x128xf32>
    %67 = arith.addf %61, %66 : vector<9x128xf32>
    %68 = vector.extract_strided_slice %0 {offsets = [2, 0, 0], sizes = [1, 9, 128], strides = [1, 1, 1]} : vector<11x11x128xf32> to vector<1x9x128xf32>
    %69 = vector.shape_cast %68 : vector<1x9x128xf32> to vector<9x128xf32>
    %c6 = arith.constant 6 : index
    %70 = memref.load %arg5[%c6] : memref<46xf32, #tpu.memory_space<smem>>
    %71 = vector.broadcast %70 : f32 to vector<9x128xf32>
    %72 = arith.mulf %69, %71 : vector<9x128xf32>
    %73 = arith.addf %67, %72 : vector<9x128xf32>
    %74 = vector.extract_strided_slice %0 {offsets = [2, 1, 0], sizes = [1, 9, 128], strides = [1, 1, 1]} : vector<11x11x128xf32> to vector<1x9x128xf32>
    %75 = vector.shape_cast %74 : vector<1x9x128xf32> to vector<9x128xf32>
    %c7 = arith.constant 7 : index
    %76 = memref.load %arg5[%c7] : memref<46xf32, #tpu.memory_space<smem>>
    %77 = vector.broadcast %76 : f32 to vector<9x128xf32>
    %78 = arith.mulf %75, %77 : vector<9x128xf32>
    %79 = arith.addf %73, %78 : vector<9x128xf32>
    %80 = vector.extract_strided_slice %0 {offsets = [2, 2, 0], sizes = [1, 9, 128], strides = [1, 1, 1]} : vector<11x11x128xf32> to vector<1x9x128xf32>
    %81 = vector.shape_cast %80 : vector<1x9x128xf32> to vector<9x128xf32>
    %c8 = arith.constant 8 : index
    %82 = memref.load %arg5[%c8] : memref<46xf32, #tpu.memory_space<smem>>
    %83 = vector.broadcast %82 : f32 to vector<9x128xf32>
    %84 = arith.mulf %81, %83 : vector<9x128xf32>
    %85 = arith.addf %79, %84 : vector<9x128xf32>
    %86 = vector.extract_strided_slice %0 {offsets = [3, 0, 0], sizes = [1, 9, 128], strides = [1, 1, 1]} : vector<11x11x128xf32> to vector<1x9x128xf32>
    %87 = vector.shape_cast %86 : vector<1x9x128xf32> to vector<9x128xf32>
    %c9 = arith.constant 9 : index
    %88 = memref.load %arg5[%c9] : memref<46xf32, #tpu.memory_space<smem>>
    %89 = vector.broadcast %88 : f32 to vector<9x128xf32>
    %90 = arith.mulf %87, %89 : vector<9x128xf32>
    %91 = arith.addf %85, %90 : vector<9x128xf32>
    %92 = vector.extract_strided_slice %0 {offsets = [3, 1, 0], sizes = [1, 9, 128], strides = [1, 1, 1]} : vector<11x11x128xf32> to vector<1x9x128xf32>
    %93 = vector.shape_cast %92 : vector<1x9x128xf32> to vector<9x128xf32>
    %c10 = arith.constant 10 : index
    %94 = memref.load %arg5[%c10] : memref<46xf32, #tpu.memory_space<smem>>
    %95 = vector.broadcast %94 : f32 to vector<9x128xf32>
    %96 = arith.mulf %93, %95 : vector<9x128xf32>
    %97 = arith.addf %91, %96 : vector<9x128xf32>
    %98 = vector.extract_strided_slice %0 {offsets = [3, 2, 0], sizes = [1, 9, 128], strides = [1, 1, 1]} : vector<11x11x128xf32> to vector<1x9x128xf32>
    %99 = vector.shape_cast %98 : vector<1x9x128xf32> to vector<9x128xf32>
    %c11 = arith.constant 11 : index
    %100 = memref.load %arg5[%c11] : memref<46xf32, #tpu.memory_space<smem>>
    %101 = vector.broadcast %100 : f32 to vector<9x128xf32>
    %102 = arith.mulf %99, %101 : vector<9x128xf32>
    %103 = arith.addf %97, %102 : vector<9x128xf32>
    %104 = vector.extract_strided_slice %0 {offsets = [4, 0, 0], sizes = [1, 9, 128], strides = [1, 1, 1]} : vector<11x11x128xf32> to vector<1x9x128xf32>
    %105 = vector.shape_cast %104 : vector<1x9x128xf32> to vector<9x128xf32>
    %c12 = arith.constant 12 : index
    %106 = memref.load %arg5[%c12] : memref<46xf32, #tpu.memory_space<smem>>
    %107 = vector.broadcast %106 : f32 to vector<9x128xf32>
    %108 = arith.mulf %105, %107 : vector<9x128xf32>
    %109 = arith.addf %103, %108 : vector<9x128xf32>
    %110 = vector.extract_strided_slice %0 {offsets = [4, 1, 0], sizes = [1, 9, 128], strides = [1, 1, 1]} : vector<11x11x128xf32> to vector<1x9x128xf32>
    %111 = vector.shape_cast %110 : vector<1x9x128xf32> to vector<9x128xf32>
    %c13 = arith.constant 13 : index
    %112 = memref.load %arg5[%c13] : memref<46xf32, #tpu.memory_space<smem>>
    %113 = vector.broadcast %112 : f32 to vector<9x128xf32>
    %114 = arith.mulf %111, %113 : vector<9x128xf32>
    %115 = arith.addf %109, %114 : vector<9x128xf32>
    %116 = vector.extract_strided_slice %0 {offsets = [4, 2, 0], sizes = [1, 9, 128], strides = [1, 1, 1]} : vector<11x11x128xf32> to vector<1x9x128xf32>
    %117 = vector.shape_cast %116 : vector<1x9x128xf32> to vector<9x128xf32>
    %c14 = arith.constant 14 : index
    %118 = memref.load %arg5[%c14] : memref<46xf32, #tpu.memory_space<smem>>
    %119 = vector.broadcast %118 : f32 to vector<9x128xf32>
    %120 = arith.mulf %117, %119 : vector<9x128xf32>
    %121 = arith.addf %115, %120 : vector<9x128xf32>
    %122 = vector.extract_strided_slice %0 {offsets = [5, 0, 0], sizes = [1, 9, 128], strides = [1, 1, 1]} : vector<11x11x128xf32> to vector<1x9x128xf32>
    %123 = vector.shape_cast %122 : vector<1x9x128xf32> to vector<9x128xf32>
    %c15 = arith.constant 15 : index
    %124 = memref.load %arg5[%c15] : memref<46xf32, #tpu.memory_space<smem>>
    %125 = vector.broadcast %124 : f32 to vector<9x128xf32>
    %126 = arith.mulf %123, %125 : vector<9x128xf32>
    %127 = arith.addf %121, %126 : vector<9x128xf32>
    %128 = vector.extract_strided_slice %0 {offsets = [5, 1, 0], sizes = [1, 9, 128], strides = [1, 1, 1]} : vector<11x11x128xf32> to vector<1x9x128xf32>
    %129 = vector.shape_cast %128 : vector<1x9x128xf32> to vector<9x128xf32>
    %c16 = arith.constant 16 : index
    %130 = memref.load %arg5[%c16] : memref<46xf32, #tpu.memory_space<smem>>
    %131 = vector.broadcast %130 : f32 to vector<9x128xf32>
    %132 = arith.mulf %129, %131 : vector<9x128xf32>
    %133 = arith.addf %127, %132 : vector<9x128xf32>
    %134 = vector.extract_strided_slice %0 {offsets = [5, 2, 0], sizes = [1, 9, 128], strides = [1, 1, 1]} : vector<11x11x128xf32> to vector<1x9x128xf32>
    %135 = vector.shape_cast %134 : vector<1x9x128xf32> to vector<9x128xf32>
    %c17 = arith.constant 17 : index
    %136 = memref.load %arg5[%c17] : memref<46xf32, #tpu.memory_space<smem>>
    %137 = vector.broadcast %136 : f32 to vector<9x128xf32>
    %138 = arith.mulf %135, %137 : vector<9x128xf32>
    %139 = arith.addf %133, %138 : vector<9x128xf32>
    %140 = vector.extract_strided_slice %0 {offsets = [6, 0, 0], sizes = [1, 9, 128], strides = [1, 1, 1]} : vector<11x11x128xf32> to vector<1x9x128xf32>
    %141 = vector.shape_cast %140 : vector<1x9x128xf32> to vector<9x128xf32>
    %c18 = arith.constant 18 : index
    %142 = memref.load %arg5[%c18] : memref<46xf32, #tpu.memory_space<smem>>
    %143 = vector.broadcast %142 : f32 to vector<9x128xf32>
    %144 = arith.mulf %141, %143 : vector<9x128xf32>
    %145 = arith.addf %139, %144 : vector<9x128xf32>
    %146 = vector.extract_strided_slice %0 {offsets = [6, 1, 0], sizes = [1, 9, 128], strides = [1, 1, 1]} : vector<11x11x128xf32> to vector<1x9x128xf32>
    %147 = vector.shape_cast %146 : vector<1x9x128xf32> to vector<9x128xf32>
    %c19 = arith.constant 19 : index
    %148 = memref.load %arg5[%c19] : memref<46xf32, #tpu.memory_space<smem>>
    %149 = vector.broadcast %148 : f32 to vector<9x128xf32>
    %150 = arith.mulf %147, %149 : vector<9x128xf32>
    %151 = arith.addf %145, %150 : vector<9x128xf32>
    %152 = vector.extract_strided_slice %0 {offsets = [6, 2, 0], sizes = [1, 9, 128], strides = [1, 1, 1]} : vector<11x11x128xf32> to vector<1x9x128xf32>
    %153 = vector.shape_cast %152 : vector<1x9x128xf32> to vector<9x128xf32>
    %c20 = arith.constant 20 : index
    %154 = memref.load %arg5[%c20] : memref<46xf32, #tpu.memory_space<smem>>
    %155 = vector.broadcast %154 : f32 to vector<9x128xf32>
    %156 = arith.mulf %153, %155 : vector<9x128xf32>
    %157 = arith.addf %151, %156 : vector<9x128xf32>
    %158 = vector.extract_strided_slice %0 {offsets = [7, 0, 0], sizes = [1, 9, 128], strides = [1, 1, 1]} : vector<11x11x128xf32> to vector<1x9x128xf32>
    %159 = vector.shape_cast %158 : vector<1x9x128xf32> to vector<9x128xf32>
    %c21 = arith.constant 21 : index
    %160 = memref.load %arg5[%c21] : memref<46xf32, #tpu.memory_space<smem>>
    %161 = vector.broadcast %160 : f32 to vector<9x128xf32>
    %162 = arith.mulf %159, %161 : vector<9x128xf32>
    %163 = arith.addf %157, %162 : vector<9x128xf32>
    %164 = vector.extract_strided_slice %0 {offsets = [7, 1, 0], sizes = [1, 9, 128], strides = [1, 1, 1]} : vector<11x11x128xf32> to vector<1x9x128xf32>
    %165 = vector.shape_cast %164 : vector<1x9x128xf32> to vector<9x128xf32>
    %c22 = arith.constant 22 : index
    %166 = memref.load %arg5[%c22] : memref<46xf32, #tpu.memory_space<smem>>
    %167 = vector.broadcast %166 : f32 to vector<9x128xf32>
    %168 = arith.mulf %165, %167 : vector<9x128xf32>
    %169 = arith.addf %163, %168 : vector<9x128xf32>
    %170 = vector.extract_strided_slice %0 {offsets = [7, 2, 0], sizes = [1, 9, 128], strides = [1, 1, 1]} : vector<11x11x128xf32> to vector<1x9x128xf32>
    %171 = vector.shape_cast %170 : vector<1x9x128xf32> to vector<9x128xf32>
    %c23 = arith.constant 23 : index
    %172 = memref.load %arg5[%c23] : memref<46xf32, #tpu.memory_space<smem>>
    %173 = vector.broadcast %172 : f32 to vector<9x128xf32>
    %174 = arith.mulf %171, %173 : vector<9x128xf32>
    %175 = arith.addf %169, %174 : vector<9x128xf32>
    %176 = vector.extract_strided_slice %0 {offsets = [8, 0, 0], sizes = [1, 9, 128], strides = [1, 1, 1]} : vector<11x11x128xf32> to vector<1x9x128xf32>
    %177 = vector.shape_cast %176 : vector<1x9x128xf32> to vector<9x128xf32>
    %c24 = arith.constant 24 : index
    %178 = memref.load %arg5[%c24] : memref<46xf32, #tpu.memory_space<smem>>
    %179 = vector.broadcast %178 : f32 to vector<9x128xf32>
    %180 = arith.mulf %177, %179 : vector<9x128xf32>
    %181 = arith.addf %175, %180 : vector<9x128xf32>
    %182 = vector.extract_strided_slice %0 {offsets = [8, 1, 0], sizes = [1, 9, 128], strides = [1, 1, 1]} : vector<11x11x128xf32> to vector<1x9x128xf32>
    %183 = vector.shape_cast %182 : vector<1x9x128xf32> to vector<9x128xf32>
    %c25 = arith.constant 25 : index
    %184 = memref.load %arg5[%c25] : memref<46xf32, #tpu.memory_space<smem>>
    %185 = vector.broadcast %184 : f32 to vector<9x128xf32>
    %186 = arith.mulf %183, %185 : vector<9x128xf32>
    %187 = arith.addf %181, %186 : vector<9x128xf32>
    %188 = vector.extract_strided_slice %0 {offsets = [8, 2, 0], sizes = [1, 9, 128], strides = [1, 1, 1]} : vector<11x11x128xf32> to vector<1x9x128xf32>
    %189 = vector.shape_cast %188 : vector<1x9x128xf32> to vector<9x128xf32>
    %c26 = arith.constant 26 : index
    %190 = memref.load %arg5[%c26] : memref<46xf32, #tpu.memory_space<smem>>
    %191 = vector.broadcast %190 : f32 to vector<9x128xf32>
    %192 = arith.mulf %189, %191 : vector<9x128xf32>
    %193 = arith.addf %187, %192 : vector<9x128xf32>
    %194 = vector.extract_strided_slice %0 {offsets = [9, 0, 0], sizes = [1, 9, 128], strides = [1, 1, 1]} : vector<11x11x128xf32> to vector<1x9x128xf32>
    %195 = vector.shape_cast %194 : vector<1x9x128xf32> to vector<9x128xf32>
    %c27 = arith.constant 27 : index
    %196 = memref.load %arg5[%c27] : memref<46xf32, #tpu.memory_space<smem>>
    %197 = vector.broadcast %196 : f32 to vector<9x128xf32>
    %198 = arith.mulf %195, %197 : vector<9x128xf32>
    %199 = arith.addf %193, %198 : vector<9x128xf32>
    %200 = vector.extract_strided_slice %0 {offsets = [9, 1, 0], sizes = [1, 9, 128], strides = [1, 1, 1]} : vector<11x11x128xf32> to vector<1x9x128xf32>
    %201 = vector.shape_cast %200 : vector<1x9x128xf32> to vector<9x128xf32>
    %c28 = arith.constant 28 : index
    %202 = memref.load %arg5[%c28] : memref<46xf32, #tpu.memory_space<smem>>
    %203 = vector.broadcast %202 : f32 to vector<9x128xf32>
    %204 = arith.mulf %201, %203 : vector<9x128xf32>
    %205 = arith.addf %199, %204 : vector<9x128xf32>
    %206 = vector.extract_strided_slice %0 {offsets = [9, 2, 0], sizes = [1, 9, 128], strides = [1, 1, 1]} : vector<11x11x128xf32> to vector<1x9x128xf32>
    %207 = vector.shape_cast %206 : vector<1x9x128xf32> to vector<9x128xf32>
    %c29 = arith.constant 29 : index
    %208 = memref.load %arg5[%c29] : memref<46xf32, #tpu.memory_space<smem>>
    %209 = vector.broadcast %208 : f32 to vector<9x128xf32>
    %210 = arith.mulf %207, %209 : vector<9x128xf32>
    %211 = arith.addf %205, %210 : vector<9x128xf32>
    %212 = vector.extract_strided_slice %0 {offsets = [10, 0, 0], sizes = [1, 9, 128], strides = [1, 1, 1]} : vector<11x11x128xf32> to vector<1x9x128xf32>
    %213 = vector.shape_cast %212 : vector<1x9x128xf32> to vector<9x128xf32>
    %c30 = arith.constant 30 : index
    %214 = memref.load %arg5[%c30] : memref<46xf32, #tpu.memory_space<smem>>
    %215 = vector.broadcast %214 : f32 to vector<9x128xf32>
    %216 = arith.mulf %213, %215 : vector<9x128xf32>
    %217 = arith.addf %211, %216 : vector<9x128xf32>
    %218 = vector.extract_strided_slice %0 {offsets = [10, 1, 0], sizes = [1, 9, 128], strides = [1, 1, 1]} : vector<11x11x128xf32> to vector<1x9x128xf32>
    %219 = vector.shape_cast %218 : vector<1x9x128xf32> to vector<9x128xf32>
    %c31 = arith.constant 31 : index
    %220 = memref.load %arg5[%c31] : memref<46xf32, #tpu.memory_space<smem>>
    %221 = vector.broadcast %220 : f32 to vector<9x128xf32>
    %222 = arith.mulf %219, %221 : vector<9x128xf32>
    %223 = arith.addf %217, %222 : vector<9x128xf32>
    %224 = vector.extract_strided_slice %0 {offsets = [10, 2, 0], sizes = [1, 9, 128], strides = [1, 1, 1]} : vector<11x11x128xf32> to vector<1x9x128xf32>
    %225 = vector.shape_cast %224 : vector<1x9x128xf32> to vector<9x128xf32>
    %c32 = arith.constant 32 : index
    %226 = memref.load %arg5[%c32] : memref<46xf32, #tpu.memory_space<smem>>
    %227 = vector.broadcast %226 : f32 to vector<9x128xf32>
    %228 = arith.mulf %225, %227 : vector<9x128xf32>
    %229 = arith.addf %223, %228 : vector<9x128xf32>
    %cst_7 = arith.constant 0.000000e+00 : f32
    %230 = vector.broadcast %cst_7 : f32 to vector<9x9x128xf32>
    %c44 = arith.constant 44 : index
    %231 = memref.load %arg5[%c44] : memref<46xf32, #tpu.memory_space<smem>>
    %232 = vector.broadcast %231 : f32 to vector<9x9x128xf32>
    %233 = arith.addf %230, %232 : vector<9x9x128xf32>
    %234 = vector.extract_strided_slice %0 {offsets = [0, 0, 0], sizes = [9, 9, 128], strides = [1, 1, 1]} : vector<11x11x128xf32> to vector<9x9x128xf32>
    %c33 = arith.constant 33 : index
    %235 = memref.load %arg5[%c33] : memref<46xf32, #tpu.memory_space<smem>>
    %236 = vector.broadcast %235 : f32 to vector<9x9x128xf32>
    %237 = arith.mulf %234, %236 : vector<9x9x128xf32>
    %238 = arith.addf %233, %237 : vector<9x9x128xf32>
    %239 = vector.extract_strided_slice %0 {offsets = [0, 1, 0], sizes = [9, 9, 128], strides = [1, 1, 1]} : vector<11x11x128xf32> to vector<9x9x128xf32>
    %c34 = arith.constant 34 : index
    %240 = memref.load %arg5[%c34] : memref<46xf32, #tpu.memory_space<smem>>
    %241 = vector.broadcast %240 : f32 to vector<9x9x128xf32>
    %242 = arith.mulf %239, %241 : vector<9x9x128xf32>
    %243 = arith.addf %238, %242 : vector<9x9x128xf32>
    %244 = vector.extract_strided_slice %0 {offsets = [0, 2, 0], sizes = [9, 9, 128], strides = [1, 1, 1]} : vector<11x11x128xf32> to vector<9x9x128xf32>
    %c35 = arith.constant 35 : index
    %245 = memref.load %arg5[%c35] : memref<46xf32, #tpu.memory_space<smem>>
    %246 = vector.broadcast %245 : f32 to vector<9x9x128xf32>
    %247 = arith.mulf %244, %246 : vector<9x9x128xf32>
    %248 = arith.addf %243, %247 : vector<9x9x128xf32>
    %249 = vector.extract_strided_slice %0 {offsets = [1, 0, 0], sizes = [9, 9, 128], strides = [1, 1, 1]} : vector<11x11x128xf32> to vector<9x9x128xf32>
    %c36 = arith.constant 36 : index
    %250 = memref.load %arg5[%c36] : memref<46xf32, #tpu.memory_space<smem>>
    %251 = vector.broadcast %250 : f32 to vector<9x9x128xf32>
    %252 = arith.mulf %249, %251 : vector<9x9x128xf32>
    %253 = arith.addf %248, %252 : vector<9x9x128xf32>
    %254 = vector.extract_strided_slice %0 {offsets = [1, 1, 0], sizes = [9, 9, 128], strides = [1, 1, 1]} : vector<11x11x128xf32> to vector<9x9x128xf32>
    %c37 = arith.constant 37 : index
    %255 = memref.load %arg5[%c37] : memref<46xf32, #tpu.memory_space<smem>>
    %256 = vector.broadcast %255 : f32 to vector<9x9x128xf32>
    %257 = arith.mulf %254, %256 : vector<9x9x128xf32>
    %258 = arith.addf %253, %257 : vector<9x9x128xf32>
    %259 = vector.extract_strided_slice %0 {offsets = [1, 2, 0], sizes = [9, 9, 128], strides = [1, 1, 1]} : vector<11x11x128xf32> to vector<9x9x128xf32>
    %c38 = arith.constant 38 : index
    %260 = memref.load %arg5[%c38] : memref<46xf32, #tpu.memory_space<smem>>
    %261 = vector.broadcast %260 : f32 to vector<9x9x128xf32>
    %262 = arith.mulf %259, %261 : vector<9x9x128xf32>
    %263 = arith.addf %258, %262 : vector<9x9x128xf32>
    %264 = vector.extract_strided_slice %0 {offsets = [2, 0, 0], sizes = [9, 9, 128], strides = [1, 1, 1]} : vector<11x11x128xf32> to vector<9x9x128xf32>
    %c39 = arith.constant 39 : index
    %265 = memref.load %arg5[%c39] : memref<46xf32, #tpu.memory_space<smem>>
    %266 = vector.broadcast %265 : f32 to vector<9x9x128xf32>
    %267 = arith.mulf %264, %266 : vector<9x9x128xf32>
    %268 = arith.addf %263, %267 : vector<9x9x128xf32>
    %269 = vector.extract_strided_slice %0 {offsets = [2, 1, 0], sizes = [9, 9, 128], strides = [1, 1, 1]} : vector<11x11x128xf32> to vector<9x9x128xf32>
    %c40 = arith.constant 40 : index
    %270 = memref.load %arg5[%c40] : memref<46xf32, #tpu.memory_space<smem>>
    %271 = vector.broadcast %270 : f32 to vector<9x9x128xf32>
    %272 = arith.mulf %269, %271 : vector<9x9x128xf32>
    %273 = arith.addf %268, %272 : vector<9x9x128xf32>
    %274 = vector.extract_strided_slice %0 {offsets = [2, 2, 0], sizes = [9, 9, 128], strides = [1, 1, 1]} : vector<11x11x128xf32> to vector<9x9x128xf32>
    %c41 = arith.constant 41 : index
    %275 = memref.load %arg5[%c41] : memref<46xf32, #tpu.memory_space<smem>>
    %276 = vector.broadcast %275 : f32 to vector<9x9x128xf32>
    %277 = arith.mulf %274, %276 : vector<9x9x128xf32>
    %278 = arith.addf %273, %277 : vector<9x9x128xf32>
    %c0_8 = arith.constant 0 : index
    %c0_9 = arith.constant 0 : index
    %279 = vector.load %arg3[%c0_8, %c0_9] : memref<10x20xf32, #tpu.memory_space<vmem>>, vector<10x20xf32>
    %280 = vector.extract_strided_slice %279 {offsets = [0, 0], sizes = [10, 9], strides = [1, 1]} : vector<10x20xf32> to vector<10x9xf32>
    %281 = vector.extract_strided_slice %279 {offsets = [0, 9], sizes = [10, 9], strides = [1, 1]} : vector<10x20xf32> to vector<10x9xf32>
    %282 = vector.extract_strided_slice %279 {offsets = [0, 18], sizes = [10, 1], strides = [1, 1]} : vector<10x20xf32> to vector<10x1xf32>
    %283 = vector.extract_strided_slice %279 {offsets = [0, 19], sizes = [10, 1], strides = [1, 1]} : vector<10x20xf32> to vector<10x1xf32>
    %cst_10 = arith.constant dense<0.000000e+00> : vector<10x128xf32>
    %284 = tpu.matmul %280, %27, %cst_10 {dimension_numbers = #tpu.dot_dimension_numbers<[1], [0], [0], [1], [0, 0, 1, 1], [], []>} : vector<10x9xf32>, vector<9x128xf32>, vector<10x128xf32> -> vector<10x128xf32>
    %285 = vector.broadcast %282 : vector<10x1xf32> to vector<10x128xf32>
    %286 = arith.addf %285, %284 : vector<10x128xf32>
    %cst_11 = arith.constant dense<0.000000e+00> : vector<10x128xf32>
    %287 = tpu.matmul %281, %229, %cst_11 {dimension_numbers = #tpu.dot_dimension_numbers<[1], [0], [0], [1], [0, 0, 1, 1], [], []>} : vector<10x9xf32>, vector<9x128xf32>, vector<10x128xf32> -> vector<10x128xf32>
    %288 = arith.addf %286, %287 : vector<10x128xf32>
    %c0_12 = arith.constant 0 : index
    %c0_13 = arith.constant 0 : index
    %c0_14 = arith.constant 0 : index
    %289 = vector.load %arg4[%c0_12, %c0_13, %c0_14] : memref<9x10x9xf32, #tpu.memory_space<vmem>>, vector<9x10x9xf32>
    "tpu.trace_start"() <{level = 10 : i32, message = "ioj,ijb->iob"}> : () -> ()
    %cst_15 = arith.constant dense<0.000000e+00> : vector<9x10x128xf32>
    %290 = tpu.matmul %289, %278, %cst_15 {dimension_numbers = #tpu.dot_dimension_numbers<[2], [1], [1], [2], [0, 0, 0, 1, 1, 2], [0], [0]>} : vector<9x10x9xf32>, vector<9x9x128xf32>, vector<9x10x128xf32> -> vector<9x10x128xf32>
    "tpu.trace_stop"() : () -> ()
    %cst_16 = arith.constant dense<0.000000e+00> : vector<10x128xf32>
    %291 = vector.multi_reduction <add>, %290, %cst_16 [0] : vector<9x10x128xf32> to vector<10x128xf32>
    %292 = arith.addf %288, %291 : vector<10x128xf32>
    %293 = vector.broadcast %283 : vector<10x1xf32> to vector<10x128xf32>
    %294 = arith.mulf %293, %292 : vector<10x128xf32>
    %cst_17 = arith.constant dense<0.000000e+00> : vector<128xf32>
    %295 = vector.multi_reduction <add>, %294, %cst_17 [0] : vector<10x128xf32> to vector<128xf32>
    %296 = vector.shape_cast %295 : vector<128xf32> to vector<1x128xf32>
    %c45 = arith.constant 45 : index
    %297 = memref.load %arg5[%c45] : memref<46xf32, #tpu.memory_space<smem>>
    %298 = vector.broadcast %297 : f32 to vector<1x128xf32>
    %299 = arith.addf %296, %298 : vector<1x128xf32>
    %c0_18 = arith.constant 0 : index
    %c0_19 = arith.constant 0 : index
    %300 = vector.load %arg6[%c0_18, %c0_19] : memref<1x128xf32, #tpu.memory_space<vmem>>, vector<1x128xf32>
    tpu.vector_store %arg6[%c0_18, %c0_19], %299 {strides = array<i32>} : memref<1x128xf32, #tpu.memory_space<vmem>>, vector<1x128xf32>,
    return
  }
  func.func @transform_0(%arg0: i32) -> (i32, i32, i32) {
    %c0_i32 = arith.constant 0 : i32
    %c0_i32_0 = arith.constant 0 : i32
    %c0_i32_1 = arith.constant 0 : i32
    return %c0_i32, %c0_i32_0, %arg0 : i32, i32, i32
  }
  func.func @transform_1(%arg0: i32) -> (i32, i32, i32) {
    %c0_i32 = arith.constant 0 : i32
    %c0_i32_0 = arith.constant 0 : i32
    %c0_i32_1 = arith.constant 0 : i32
    %c0_i32_2 = arith.constant 0 : i32
    return %c0_i32, %c0_i32_0, %c0_i32_1 : i32, i32, i32
  }
  func.func @transform_2(%arg0: i32) -> (i32, i32) {
    %c0_i32 = arith.constant 0 : i32
    %c0_i32_0 = arith.constant 0 : i32
    %c0_i32_1 = arith.constant 0 : i32
    return %c0_i32, %c0_i32_0 : i32, i32
  }
  func.func @transform_3(%arg0: i32) -> (i32, i32, i32) {
    %c0_i32 = arith.constant 0 : i32
    %c0_i32_0 = arith.constant 0 : i32
    %c0_i32_1 = arith.constant 0 : i32
    %c0_i32_2 = arith.constant 0 : i32
    return %c0_i32, %c0_i32_0, %c0_i32_1 : i32, i32, i32
  }
  func.func @transform_4(%arg0: i32) -> i32 {
    %c0_i32 = arith.constant 0 : i32
    %c0_i32_0 = arith.constant 0 : i32
    return %c0_i32 : i32
  }
  func.func @transform_5(%arg0: i32) -> (i32, i32) {
    %c0_i32 = arith.constant 0 : i32
    %c0_i32_0 = arith.constant 0 : i32
    return %c0_i32, %arg0 : i32, i32
  }
}

</mosaic_0001>

<llo_original>
// kernel: tpu_custom_call.1
$region0: #{tpu_custom_call.1}
  #allocation0 [shape = 'u32[]', space=smem, size = 0x4, offset = 0x4, fixed_abs, tag = 'smem constant byte address 0x4 - core index']
  #allocation1 [shape = 'u32[144,128]{1,0:T(1,128)}', space=vmem, size = 0x12000, scoped, tag = 'internal scratch']
  %s0 = inlined_call_operand.hbm [shape: f32[11,11,256], index: 0, kind: input, shape index: {}]
  %s1 = inlined_call_operand.vmem [shape: f32[3,11,1], index: 1, kind: input, shape index: {}]
  %s2 = inlined_call_operand.vmem [shape: f32[10,20], index: 2, kind: input, shape index: {}]
  %s3 = inlined_call_operand.hbm [shape: f32[9,10,9], index: 3, kind: input, shape index: {}]
  %s4 = inlined_call_operand.vmem [shape: f32[46], index: 4, kind: input, shape index: {}]
  %s5 = inlined_call_operand.hbm [shape: f32[1,256], index: 5, kind: output, shape index: {}]
  %s6 = sld [smem:[#allocation0]]
  $region65: #{tpu_custom_call.1} parent=0
    _
  %s8 = ssub.s32 1, %s6
  %s9 = scalar_select 0, %s8, %s6
  $region1: #{tpu_custom_call.1} parent=0
    #allocation2 [shape = 'u8[180224]{0}', space=vmem, size = 0x2c000, scoped, tag = 'input window, operand 0']
    #allocation3 [shape = 's32[2]{0}', space=sflag, size = 0x8, scoped, tag = 'scoped memory for tpu_custom_call.1']
    #allocation4 [shape = 's32[2]{0}', space=sflag, size = 0x8, scoped, tag = 'scoped memory for tpu_custom_call.1']
    #allocation5 [shape = 's32[2]{0}', space=sflag, size = 0x8, scoped, tag = 'scoped memory for tpu_custom_call.1']
    #allocation6 [shape = 'u8[73728]{0}', space=vmem, size = 0x12000, scoped, tag = 'input window, operand 3, single buffered']
    #allocation7 [shape = 's32[1]{0}', space=sflag, size = 0x4, scoped, tag = 'scoped memory for tpu_custom_call.1']
    #allocation8 [shape = 'u8[512]{0}', space=smem, size = 0x200, scoped, tag = 'input window, operand 4, single buffered']
    #allocation9 [shape = 'u8[1024]{0}', space=vmem, size = 0x400, scoped, tag = 'output window, operand 0']
    %10 = vsyncpa [#allocation3], 0
    %s11 = scalar_lea.sflag [#allocation3], 1
    %12 = vsyncpa %s11, 0
    %13 = vsyncpa [#allocation7], 0
    %14 = vsyncpa [#allocation5], 0
    %15 = vsyncpa [#allocation4], 0
    %s16 = scalar_lea.sflag [#allocation4], 1
    %17 = vsyncpa %s16, 0
    loop: start=0, step=1, limit=4
    $region2: #{tpu_custom_call.1} parent=1 // loop_pre_header
      _
    $region3: #{tpu_custom_call.1} parent=1 // loop_header
      %s19 = sphi 0, %s23
      %p20 = scmp.ge.s32.totalorder %s19, 4
      %s29 = sphi 0, %s31
      %s32 = sphi 0, %s29
      %s33 = sphi 0, %s32
      %s49 = sphi 0, %s33
      %s53 = sphi 0, %s53
      %s55 = sphi 0, %s53
      %s56 = sphi 0, %s55
      %s70 = sphi 0, %s56
      %s74 = sphi 0, %s74
      %s76 = sphi 0, %s74
      %s77 = sphi 0, %s76
      %s91 = sphi 0, %s77
      %s95 = sphi 0, %s95
      %s97 = sphi 0, %s95
      %s98 = sphi 0, %s97
      %s112 = sphi 0, %s98
      %s116 = sphi 0, %s116
      %s118 = sphi 0, %s116
      %s119 = sphi 0, %s118
      %s133 = sphi 0, %s119
      %s139 = sphi 0, %s141
      %s142 = sphi 0, %s139
      %s143 = sphi 0, %s142
      %s159 = sphi 0, %s143
    $region4: #{tpu_custom_call.1} parent=1 // loop_header_branch
      %22 = sbr.rel (%p20) target = $region8
    $region5: #{tpu_custom_call.1} parent=1 // loop_body
      %s24 = ssub.s32 %s19, 1
      %s25 = ssub.s32 %s19, 2
      %s26 = sadd.s32 %s19, 1
      %s27 = ssub.s32 %s19, %s26
      %p28 = scmp.eq.s32.totalorder %s27, 0
      %s30 = sadd.s32 %s29, 1
      %s31 = scalar_select %p28, %s29, %s30
      %p34 = pneg %p28
      %p35 = scmp.eq.s32.totalorder %s19, 1
      %p36 = por %p34, %p35
      %p37 = scmp.ne.s32.totalorder %s29, %s32
      %p38 = scmp.eq.s32.totalorder %s19, 0
      %p39 = por %p37, %p38
      %p40 = scmp.ne.s32.totalorder %s29, %s32
      %p41 = scmp.eq.s32.totalorder %s24, 1
      %p42 = por %p40, %p41
      %p43 = scmp.ne.s32.totalorder %s32, %s33
      %p44 = scmp.eq.s32.totalorder %s24, 0
      %p45 = por %p43, %p44
      %p46 = scmp.ne.s32.totalorder %s32, %s33
      %p47 = scmp.eq.s32.totalorder %s25, 1
      %p48 = por %p46, %p47
      %p50 = scmp.ne.s32.totalorder %s33, %s49
      %p51 = scmp.eq.s32.totalorder %s25, 0
      %p52 = por %p50, %p51
      %s54 = sadd.s32 %s53, 1
      %p57 = scmp.eq.s32.totalorder %s19, 1
      %p58 = scmp.ne.s32.totalorder %s53, %s55
      %p59 = scmp.eq.s32.totalorder %s19, 0
      %p60 = por %p58, %p59
      %p61 = scmp.ne.s32.totalorder %s53, %s55
      %p62 = scmp.eq.s32.totalorder %s24, 1
      %p63 = por %p61, %p62
      %p64 = scmp.ne.s32.totalorder %s55, %s56
      %p65 = scmp.eq.s32.totalorder %s24, 0
      %p66 = por %p64, %p65
      %p67 = scmp.ne.s32.totalorder %s55, %s56
      %p68 = scmp.eq.s32.totalorder %s25, 1
      %p69 = por %p67, %p68
      %p71 = scmp.ne.s32.totalorder %s56, %s70
      %p72 = scmp.eq.s32.totalorder %s25, 0
      %p73 = por %p71, %p72
      %s75 = sadd.s32 %s74, 1
      %p78 = scmp.eq.s32.totalorder %s19, 1
      %p79 = scmp.ne.s32.totalorder %s74, %s76
      %p80 = scmp.eq.s32.totalorder %s19, 0
      %p81 = por %p79, %p80
      %p82 = scmp.ne.s32.totalorder %s74, %s76
      %p83 = scmp.eq.s32.totalorder %s24, 1
      %p84 = por %p82, %p83
      %p85 = scmp.ne.s32.totalorder %s76, %s77
      %p86 = scmp.eq.s32.totalorder %s24, 0
      %p87 = por %p85, %p86
      %p88 = scmp.ne.s32.totalorder %s76, %s77
      %p89 = scmp.eq.s32.totalorder %s25, 1
      %p90 = por %p88, %p89
      %p92 = scmp.ne.s32.totalorder %s77, %s91
      %p93 = scmp.eq.s32.totalorder %s25, 0
      %p94 = por %p92, %p93
      %s96 = sadd.s32 %s95, 1
      %p99 = scmp.eq.s32.totalorder %s19, 1
      %p100 = scmp.ne.s32.totalorder %s95, %s97
      %p101 = scmp.eq.s32.totalorder %s19, 0
      %p102 = por %p100, %p101
      %p103 = scmp.ne.s32.totalorder %s95, %s97
      %p104 = scmp.eq.s32.totalorder %s24, 1
      %p105 = por %p103, %p104
      %p106 = scmp.ne.s32.totalorder %s97, %s98
      %p107 = scmp.eq.s32.totalorder %s24, 0
      %p108 = por %p106, %p107
      %p109 = scmp.ne.s32.totalorder %s97, %s98
      %p110 = scmp.eq.s32.totalorder %s25, 1
      %p111 = por %p109, %p110
      %p113 = scmp.ne.s32.totalorder %s98, %s112
      %p114 = scmp.eq.s32.totalorder %s25, 0
      %p115 = por %p113, %p114
      %s117 = sadd.s32 %s116, 1
      %p120 = scmp.eq.s32.totalorder %s19, 1
      %p121 = scmp.ne.s32.totalorder %s116, %s118
      %p122 = scmp.eq.s32.totalorder %s19, 0
      %p123 = por %p121, %p122
      %p124 = scmp.ne.s32.totalorder %s116, %s118
      %p125 = scmp.eq.s32.totalorder %s24, 1
      %p126 = por %p124, %p125
      %p127 = scmp.ne.s32.totalorder %s118, %s119
      %p128 = scmp.eq.s32.totalorder %s24, 0
      %p129 = por %p127, %p128
      %p130 = scmp.ne.s32.totalorder %s118, %s119
      %p131 = scmp.eq.s32.totalorder %s25, 1
      %p132 = por %p130, %p131
      %p134 = scmp.ne.s32.totalorder %s119, %s133
      %p135 = scmp.eq.s32.totalorder %s25, 0
      %p136 = por %p134, %p135
      %s137 = ssub.s32 %s19, %s26
      %p138 = scmp.eq.s32.totalorder %s137, 0
      %s140 = sadd.s32 %s139, 1
      %s141 = scalar_select %p138, %s139, %s140
      %p144 = pneg %p138
      %p145 = scmp.eq.s32.totalorder %s19, 1
      %p146 = por %p144, %p145
      %p147 = scmp.ne.s32.totalorder %s139, %s142
      %p148 = scmp.eq.s32.totalorder %s19, 0
      %p149 = por %p147, %p148
      %p150 = scmp.ne.s32.totalorder %s139, %s142
      %p151 = scmp.eq.s32.totalorder %s24, 1
      %p152 = por %p150, %p151
      %p153 = scmp.ne.s32.totalorder %s142, %s143
      %p154 = scmp.eq.s32.totalorder %s24, 0
      %p155 = por %p153, %p154
      %p156 = scmp.ne.s32.totalorder %s142, %s143
      %p157 = scmp.eq.s32.totalorder %s25, 1
      %p158 = por %p156, %p157
      %p160 = scmp.ne.s32.totalorder %s143, %s159
      %p161 = scmp.eq.s32.totalorder %s25, 0
      %p162 = por %p160, %p161
      %p163 = scmp.le.s32.totalorder 1, %s19
      %p164 = scmp.lt.s32.totalorder %s19, 3
      %p165 = pnand %p163, %p164
      %p166 = pneg %p165
      // Predicated region
      $region9: #{tpu_custom_call.1} parent=5 // pred_check
        _
      $region10: #{tpu_custom_call.1} parent=5 // pred_check_branch
        %168 = sbr.rel (%p165) target = $region12
      $region11: #{tpu_custom_call.1} parent=5 // pred_region
        %s169 = ssub.s32 %s19, 1
        // Predicated region
        $region13: #{tpu_custom_call.1} parent=11 // pred_check
          %p170 = pneg %p66
        $region14: #{tpu_custom_call.1} parent=11 // pred_check_branch
          %172 = sbr.rel (%p170) target = $region16
        $region15: #{tpu_custom_call.1} parent=11 // pred_region
          _
        $region16: #{tpu_custom_call.1} parent=11 // pred_fallthru
          _
        // Predicated region
        $region17: #{tpu_custom_call.1} parent=11 // pred_check
          %p173 = pneg %p87
        $region18: #{tpu_custom_call.1} parent=11 // pred_check_branch
          %175 = sbr.rel (%p173) target = $region20
        $region19: #{tpu_custom_call.1} parent=11 // pred_region
          _
        $region20: #{tpu_custom_call.1} parent=11 // pred_fallthru
          _
        // Predicated region
        $region21: #{tpu_custom_call.1} parent=11 // pred_check
          %p176 = pneg %p108
        $region22: #{tpu_custom_call.1} parent=11 // pred_check_branch
          %178 = sbr.rel (%p176) target = $region24
        $region23: #{tpu_custom_call.1} parent=11 // pred_region
          %s180 = ssub.s32 2304, 2304
          %181 = vsyncadd [#allocation7], %s180
          %s182 = sshll.u32 [#allocation6], 4
          %s183 = int_to_ptr.vmem [resolvable:$true] %s182
          %188 = dma.hbm_to_vmem [thread:$0]  %s3, 2304, %s183, [#allocation7], 128, 128, 8
        $region24: #{tpu_custom_call.1} parent=11 // pred_fallthru
          _
        // Predicated region
        $region25: #{tpu_custom_call.1} parent=11 // pred_check
          %p189 = pneg %p129
        $region26: #{tpu_custom_call.1} parent=11 // pred_check_branch
          %191 = sbr.rel (%p189) target = $region28
        $region27: #{tpu_custom_call.1} parent=11 // pred_region
          %s193 = ssub.s32 16, 16
          %194 = vsyncadd [#allocation5], %s193
          %s196 = sshll.u32 %s4, 4
          %s197 = int_to_ptr.vmem [resolvable:$true] %s196
          %199 = dma.vmem_to_smem %s197, 16, [#allocation8], [#allocation5]
        $region28: #{tpu_custom_call.1} parent=11 // pred_fallthru
          _
      $region12: #{tpu_custom_call.1} parent=5 // pred_fallthru
        _
      %p200 = scmp.lt.s32.totalorder %s19, 2
      // Predicated region
      $region29: #{tpu_custom_call.1} parent=5 // pred_check
        %p201 = pneg %p200
      $region30: #{tpu_custom_call.1} parent=5 // pred_check_branch
        %203 = sbr.rel (%p201) target = $region32
      $region31: #{tpu_custom_call.1} parent=5 // pred_region
        // Predicated region
        $region33: #{tpu_custom_call.1} parent=31 // pred_check
          %p204 = pneg %p39
        $region34: #{tpu_custom_call.1} parent=31 // pred_check_branch
          %206 = sbr.rel (%p204) target = $region36
        $region35: #{tpu_custom_call.1} parent=31 // pred_region
          %s207 = sand.u32 %s29, 1
          %s208 = scalar_lea.sflag [#allocation3], %s207
          %s209 = sand.u32 %s29, 1
          %s210 = smul.addr %s209, 176
          %s211 = scalar_lea.vmem [#allocation2], %s210
          %s213 = ssub.s32 2816, 2816
          %214 = vsyncadd %s208, %s213
          %s215 = smul.addr %s19, 128
          %s216 = scalar_lea.hbm %s0, %s215
          %s217 = sshll.u32 %s211, 4
          %s218 = int_to_ptr.vmem [resolvable:$true] %s217
          %223 = dma.hbm_to_vmem [thread:$0]  %s216, 2816, %s218, %s208, 256, 128, 8
        $region36: #{tpu_custom_call.1} parent=31 // pred_fallthru
          _
      $region32: #{tpu_custom_call.1} parent=5 // pred_fallthru
        _
      %p224 = scmp.le.s32.totalorder 1, %s19
      %p225 = scmp.lt.s32.totalorder %s19, 3
      %p226 = pnand %p224, %p225
      %p227 = pneg %p226
      // Predicated region
      $region37: #{tpu_custom_call.1} parent=5 // pred_check
        _
      $region38: #{tpu_custom_call.1} parent=5 // pred_check_branch
        %229 = sbr.rel (%p226) target = $region40
      $region39: #{tpu_custom_call.1} parent=5 // pred_region
        %s230 = ssub.s32 %s19, 1
        %s231 = sand.u32 %s32, 1
        %s232 = scalar_lea.sflag [#allocation3], %s231
        %s233 = sand.u32 %s32, 1
        %s234 = smul.addr %s233, 176
        %s235 = scalar_lea.vmem [#allocation2], %s234
        // Predicated region
        $region41: #{tpu_custom_call.1} parent=39 // pred_check
          %p236 = pneg %p45
        $region42: #{tpu_custom_call.1} parent=39 // pred_check_branch
          %238 = sbr.rel (%p236) target = $region44
        $region43: #{tpu_custom_call.1} parent=39 // pred_region
          %239 = dma.done %s232, 2816
        $region44: #{tpu_custom_call.1} parent=39 // pred_fallthru
          _
        // Predicated region
        $region45: #{tpu_custom_call.1} parent=39 // pred_check
          %p240 = pneg %p108
        $region46: #{tpu_custom_call.1} parent=39 // pred_check_branch
          %242 = sbr.rel (%p240) target = $region48
        $region47: #{tpu_custom_call.1} parent=39 // pred_region
          %243 = dma.done [#allocation7], 2304
        $region48: #{tpu_custom_call.1} parent=39 // pred_fallthru
          _
        // Predicated region
        $region49: #{tpu_custom_call.1} parent=39 // pred_check
          %p244 = pneg %p129
        $region50: #{tpu_custom_call.1} parent=39 // pred_check_branch
          %246 = sbr.rel (%p244) target = $region52
        $region51: #{tpu_custom_call.1} parent=39 // pred_region
          %247 = dma.done [#allocation5], 16
        $region52: #{tpu_custom_call.1} parent=39 // pred_fallthru
          _
        %248 = sfence
        %s249 = sand.u32 %s32, 1
        %s250 = scalar_lea.sflag [#allocation3], %s249
        %s251 = sand.u32 %s32, 1
        %s252 = smul.addr %s251, 176
        %s253 = scalar_lea.vmem [#allocation2], %s252
        %p254 = pneg %p45
        %p255 = pneg %p42
        %p256 = pneg %p66
        %p257 = pneg %p63
        %p258 = pneg %p87
        %p259 = pneg %p84
        %p260 = pneg %p108
        %p261 = pneg %p105
        %p262 = pneg %p129
        %p263 = pneg %p126
        %p264 = pneg %p155
        %p265 = pneg %p152
        %s266 = sand.u32 %s142, 1
        %s267 = scalar_lea.sflag [#allocation4], %s266
        %s268 = sand.u32 %s142, 1
        %s269 = scalar_lea.vmem [#allocation9], %s268
        %v270 = vld [vmem:[%s235] sm:$0xff]
        %v271 = vld [vmem:[%s235 + $0x8] sm:$0x7]
        %v272 = vld [vmem:[%s235 + $0x10] sm:$0xff]
        %v273 = vld [vmem:[%s235 + $0x18] sm:$0x7]
        %v274 = vld [vmem:[%s235 + $0x20] sm:$0xff]
        %v275 = vld [vmem:[%s235 + $0x28] sm:$0x7]
        %v276 = vld [vmem:[%s235 + $0x30] sm:$0xff]
        %v277 = vld [vmem:[%s235 + $0x38] sm:$0x7]
        %v278 = vld [vmem:[%s235 + $0x40] sm:$0xff]
        %v279 = vld [vmem:[%s235 + $0x48] sm:$0x7]
        %v280 = vld [vmem:[%s235 + $0x50] sm:$0xff]
        %v281 = vld [vmem:[%s235 + $0x58] sm:$0x7]
        %v282 = vld [vmem:[%s235 + $0x60] sm:$0xff]
        %v283 = vld [vmem:[%s235 + $0x68] sm:$0x7]
        %v284 = vld [vmem:[%s235 + $0x70] sm:$0xff]
        %v285 = vld [vmem:[%s235 + $0x78] sm:$0x7]
        %v286 = vld [vmem:[%s235 + $0x80] sm:$0xff]
        %v287 = vld [vmem:[%s235 + $0x88] sm:$0x7]
        %v288 = vld [vmem:[%s235 + $0x90] sm:$0xff]
        %v289 = vld [vmem:[%s235 + $0x98] sm:$0x7]
        %v290 = vld [vmem:[%s235 + $0xa0] sm:$0xff]
        %v291 = vld [vmem:[%s235 + $0xa8] sm:$0x7]
        %v292 = vld [vmem:[%s1] sm:$0xff]
        %v293 = vld [vmem:[%s1 + $0x8] sm:$0x7]
        %v294 = vld [vmem:[%s1 + $0x10] sm:$0xff]
        %v295 = vld [vmem:[%s1 + $0x18] sm:$0x7]
        %v296 = vld [vmem:[%s1 + $0x20] sm:$0xff]
        %v297 = vld [vmem:[%s1 + $0x28] sm:$0x7]
        %299 = vset.pattern.permute.xlu0 0
        %300 = vperm.xlu0 %299, %v292
        %v301 = vpop.permute.xlu0 %300
        %304 = vset.pattern.permute.xlu0 0
        %305 = vperm.xlu0 %304, %v293
        %v306 = vpop.permute.xlu0 %305
        %v308 = vmul.f32 %v270, %v301
        %v309 = vmul.f32 %v271, %v306
        %v310 = vmul.f32 %v272, %v301
        %v311 = vmul.f32 %v273, %v306
        %v312 = vmul.f32 %v274, %v301
        %v313 = vmul.f32 %v275, %v306
        %v314 = vmul.f32 %v276, %v301
        %v315 = vmul.f32 %v277, %v306
        %v316 = vmul.f32 %v278, %v301
        %v317 = vmul.f32 %v279, %v306
        %v318 = vmul.f32 %v280, %v301
        %v319 = vmul.f32 %v281, %v306
        %v320 = vmul.f32 %v282, %v301
        %v321 = vmul.f32 %v283, %v306
        %v322 = vmul.f32 %v284, %v301
        %v323 = vmul.f32 %v285, %v306
        %v324 = vmul.f32 %v286, %v301
        %v325 = vmul.f32 %v287, %v306
        %327 = vset.pattern.permute.xlu0 0
        %328 = vperm.xlu0 %327, %v294
        %v329 = vpop.permute.xlu0 %328
        %332 = vset.pattern.permute.xlu0 0
        %333 = vperm.xlu0 %332, %v295
        %v334 = vpop.permute.xlu0 %333
        %v336 = vmul.f32 %v272, %v329
        %v337 = vmul.f32 %v273, %v334
        %v338 = vmul.f32 %v274, %v329
        %v339 = vmul.f32 %v275, %v334
        %v340 = vmul.f32 %v276, %v329
        %v341 = vmul.f32 %v277, %v334
        %v342 = vmul.f32 %v278, %v329
        %v343 = vmul.f32 %v279, %v334
        %v344 = vmul.f32 %v280, %v329
        %v345 = vmul.f32 %v281, %v334
        %v346 = vmul.f32 %v282, %v329
        %v347 = vmul.f32 %v283, %v334
        %v348 = vmul.f32 %v284, %v329
        %v349 = vmul.f32 %v285, %v334
        %v350 = vmul.f32 %v286, %v329
        %v351 = vmul.f32 %v287, %v334
        %v352 = vmul.f32 %v288, %v329
        %v353 = vmul.f32 %v289, %v334
        %v354 = vadd.f32 %v308, %v336
        %v355 = vadd.f32 %v309, %v337
        %v356 = vadd.f32 %v310, %v338
        %v357 = vadd.f32 %v311, %v339
        %v358 = vadd.f32 %v312, %v340
        %v359 = vadd.f32 %v313, %v341
        %v360 = vadd.f32 %v314, %v342
        %v361 = vadd.f32 %v315, %v343
        %v362 = vadd.f32 %v316, %v344
        %v363 = vadd.f32 %v317, %v345
        %v364 = vadd.f32 %v318, %v346
        %v365 = vadd.f32 %v319, %v347
        %v366 = vadd.f32 %v320, %v348
        %v367 = vadd.f32 %v321, %v349
        %v368 = vadd.f32 %v322, %v350
        %v369 = vadd.f32 %v323, %v351
        %v370 = vadd.f32 %v324, %v352
        %v371 = vadd.f32 %v325, %v353
        %373 = vset.pattern.permute.xlu0 0
        %374 = vperm.xlu0 %373, %v296
        %v375 = vpop.permute.xlu0 %374
        %378 = vset.pattern.permute.xlu0 0
        %379 = vperm.xlu0 %378, %v297
        %v380 = vpop.permute.xlu0 %379
        %v382 = vmul.f32 %v274, %v375
        %v383 = vmul.f32 %v275, %v380
        %v384 = vmul.f32 %v276, %v375
        %v385 = vmul.f32 %v277, %v380
        %v386 = vmul.f32 %v278, %v375
        %v387 = vmul.f32 %v279, %v380
        %v388 = vmul.f32 %v280, %v375
        %v389 = vmul.f32 %v281, %v380
        %v390 = vmul.f32 %v282, %v375
        %v391 = vmul.f32 %v283, %v380
        %v392 = vmul.f32 %v284, %v375
        %v393 = vmul.f32 %v285, %v380
        %v394 = vmul.f32 %v286, %v375
        %v395 = vmul.f32 %v287, %v380
        %v396 = vmul.f32 %v288, %v375
        %v397 = vmul.f32 %v289, %v380
        %v398 = vmul.f32 %v290, %v375
        %v399 = vmul.f32 %v291, %v380
        %v400 = vadd.f32 %v354, %v382
        %v401 = vadd.f32 %v355, %v383
        %v402 = vadd.f32 %v356, %v384
        %v403 = vadd.f32 %v357, %v385
        %v404 = vadd.f32 %v358, %v386
        %v405 = vadd.f32 %v359, %v387
        %v406 = vadd.f32 %v360, %v388
        %v407 = vadd.f32 %v361, %v389
        %v408 = vadd.f32 %v362, %v390
        %v409 = vadd.f32 %v363, %v391
        %v410 = vadd.f32 %v364, %v392
        %v411 = vadd.f32 %v365, %v393
        %v412 = vadd.f32 %v366, %v394
        %v413 = vadd.f32 %v367, %v395
        %v414 = vadd.f32 %v368, %v396
        %v415 = vadd.f32 %v369, %v397
        %v416 = vadd.f32 %v370, %v398
        %v417 = vadd.f32 %v371, %v399
        %vm418 = vcmask 1042432
        %v419 = vsel %vm418, %v401, 0.0
        %v420 = vadd.f32 %v400, %v419
        %v421 = vrot.slane %v420, 4
        %v422 = vadd.f32 %v420, %v421
        %v423 = vrot.slane %v422, 2
        %v424 = vadd.f32 %v422, %v423
        %v425 = vrot.slane %v424, 1
        %v426 = vadd.f32 %v424, %v425
        %v427 = vsel %vm418, %v403, 0.0
        %v428 = vadd.f32 %v402, %v427
        %v429 = vrot.slane %v428, 4
        %v430 = vadd.f32 %v428, %v429
        %v431 = vrot.slane %v430, 2
        %v432 = vadd.f32 %v430, %v431
        %v433 = vrot.slane %v432, 1
        %v434 = vadd.f32 %v432, %v433
        %v435 = vsel %vm418, %v405, 0.0
        %v436 = vadd.f32 %v404, %v435
        %v437 = vrot.slane %v436, 4
        %v438 = vadd.f32 %v436, %v437
        %v439 = vrot.slane %v438, 2
        %v440 = vadd.f32 %v438, %v439
        %v441 = vrot.slane %v440, 1
        %v442 = vadd.f32 %v440, %v441
        %v443 = vsel %vm418, %v407, 0.0
        %v444 = vadd.f32 %v406, %v443
        %v445 = vrot.slane %v444, 4
        %v446 = vadd.f32 %v444, %v445
        %v447 = vrot.slane %v446, 2
        %v448 = vadd.f32 %v446, %v447
        %v449 = vrot.slane %v448, 1
        %v450 = vadd.f32 %v448, %v449
        %v451 = vsel %vm418, %v409, 0.0
        %v452 = vadd.f32 %v408, %v451
        %v453 = vrot.slane %v452, 4
        %v454 = vadd.f32 %v452, %v453
        %v455 = vrot.slane %v454, 2
        %v456 = vadd.f32 %v454, %v455
        %v457 = vrot.slane %v456, 1
        %v458 = vadd.f32 %v456, %v457
        %v459 = vsel %vm418, %v411, 0.0
        %v460 = vadd.f32 %v410, %v459
        %v461 = vrot.slane %v460, 4
        %v462 = vadd.f32 %v460, %v461
        %v463 = vrot.slane %v462, 2
        %v464 = vadd.f32 %v462, %v463
        %v465 = vrot.slane %v464, 1
        %v466 = vadd.f32 %v464, %v465
        %v467 = vsel %vm418, %v413, 0.0
        %v468 = vadd.f32 %v412, %v467
        %v469 = vrot.slane %v468, 4
        %v470 = vadd.f32 %v468, %v469
        %v471 = vrot.slane %v470, 2
        %v472 = vadd.f32 %v470, %v471
        %v473 = vrot.slane %v472, 1
        %v474 = vadd.f32 %v472, %v473
        %v475 = vsel %vm418, %v415, 0.0
        %v476 = vadd.f32 %v414, %v475
        %v477 = vrot.slane %v476, 4
        %v478 = vadd.f32 %v476, %v477
        %v479 = vrot.slane %v478, 2
        %v480 = vadd.f32 %v478, %v479
        %v481 = vrot.slane %v480, 1
        %v482 = vadd.f32 %v480, %v481
        %v483 = vsel %vm418, %v417, 0.0
        %v484 = vadd.f32 %v416, %v483
        %v485 = vrot.slane %v484, 4
        %v486 = vadd.f32 %v484, %v485
        %v487 = vrot.slane %v486, 2
        %v488 = vadd.f32 %v486, %v487
        %v489 = vrot.slane %v488, 1
        %v490 = vadd.f32 %v488, %v489
        %s491 = sld [smem:[#allocation8 + $0x2a]]
        %v492 = vstv %s491
        %v493 = vadd.f32 %v426, %v492
        %v494 = vadd.f32 %v434, %v492
        %v495 = vadd.f32 %v442, %v492
        %v496 = vadd.f32 %v450, %v492
        %v497 = vadd.f32 %v458, %v492
        %v498 = vadd.f32 %v466, %v492
        %v499 = vadd.f32 %v474, %v492
        %v500 = vadd.f32 %v482, %v492
        %v501 = vadd.f32 %v490, %v492
        %s502 = sld [smem:[#allocation8 + $0x2b]]
        %v503 = vstv %s502
        %v504 = vadd.f32 %v503, 0.0
        %s505 = sld [smem:[#allocation8]]
        %v506 = vstv %s505
        %v507 = vmul.f32 %v270, %v506
        %v508 = vmul.f32 %v271, %v506
        %v509 = vadd.f32 %v504, %v507
        %v510 = vadd.f32 %v504, %v508
        %s511 = sld [smem:[#allocation8 + $0x1]]
        %v512 = vstv %s511
        %v513 = vmul.f32 %v270, %v512
        %v514 = vmul.f32 %v271, %v512
        %vm517 = vcmask 1046528
        %v518 = vrot.slane %v513, 1
        %v519 = vrot.slane %v514, 1
        %v520 = vsel %vm517, %v518, %v519
        %v523 = vadd.f32 %v509, %v520
        %v524 = vadd.f32 %v510, %v519
        %s525 = sld [smem:[#allocation8 + $0x2]]
        %v526 = vstv %s525
        %v527 = vmul.f32 %v270, %v526
        %v528 = vmul.f32 %v271, %v526
        %vm531 = vcmask 1045504
        %v532 = vrot.slane %v527, 2
        %v533 = vrot.slane %v528, 2
        %v534 = vsel %vm531, %v532, %v533
        %v537 = vadd.f32 %v523, %v534
        %v538 = vadd.f32 %v524, %v533
        %s539 = sld [smem:[#allocation8 + $0x3]]
        %v540 = vstv %s539
        %v541 = vmul.f32 %v272, %v540
        %v542 = vmul.f32 %v273, %v540
        %v543 = vadd.f32 %v537, %v541
        %v544 = vadd.f32 %v538, %v542
        %s545 = sld [smem:[#allocation8 + $0x4]]
        %v546 = vstv %s545
        %v547 = vmul.f32 %v272, %v546
        %v548 = vmul.f32 %v273, %v546
        %v551 = vrot.slane %v547, 1
        %v552 = vrot.slane %v548, 1
        %v553 = vsel %vm517, %v551, %v552
        %v556 = vadd.f32 %v543, %v553
        %v557 = vadd.f32 %v544, %v552
        %s558 = sld [smem:[#allocation8 + $0x5]]
        %v559 = vstv %s558
        %v560 = vmul.f32 %v272, %v559
        %v561 = vmul.f32 %v273, %v559
        %v564 = vrot.slane %v560, 2
        %v565 = vrot.slane %v561, 2
        %v566 = vsel %vm531, %v564, %v565
        %v569 = vadd.f32 %v556, %v566
        %v570 = vadd.f32 %v557, %v565
        %s571 = sld [smem:[#allocation8 + $0x6]]
        %v572 = vstv %s571
        %v573 = vmul.f32 %v274, %v572
        %v574 = vmul.f32 %v275, %v572
        %v575 = vadd.f32 %v569, %v573
        %v576 = vadd.f32 %v570, %v574
        %s577 = sld [smem:[#allocation8 + $0x7]]
        %v578 = vstv %s577
        %v579 = vmul.f32 %v274, %v578
        %v580 = vmul.f32 %v275, %v578
        %v583 = vrot.slane %v579, 1
        %v584 = vrot.slane %v580, 1
        %v585 = vsel %vm517, %v583, %v584
        %v588 = vadd.f32 %v575, %v585
        %v589 = vadd.f32 %v576, %v584
        %s590 = sld [smem:[#allocation8 + $0x8]]
        %v591 = vstv %s590
        %v592 = vmul.f32 %v274, %v591
        %v593 = vmul.f32 %v275, %v591
        %v596 = vrot.slane %v592, 2
        %v597 = vrot.slane %v593, 2
        %v598 = vsel %vm531, %v596, %v597
        %v601 = vadd.f32 %v588, %v598
        %v602 = vadd.f32 %v589, %v597
        %s603 = sld [smem:[#allocation8 + $0x9]]
        %v604 = vstv %s603
        %v605 = vmul.f32 %v276, %v604
        %v606 = vmul.f32 %v277, %v604
        %v607 = vadd.f32 %v601, %v605
        %v608 = vadd.f32 %v602, %v606
        %s609 = sld [smem:[#allocation8 + $0xa]]
        %v610 = vstv %s609
        %v611 = vmul.f32 %v276, %v610
        %v612 = vmul.f32 %v277, %v610
        %v615 = vrot.slane %v611, 1
        %v616 = vrot.slane %v612, 1
        %v617 = vsel %vm517, %v615, %v616
        %v620 = vadd.f32 %v607, %v617
        %v621 = vadd.f32 %v608, %v616
        %s622 = sld [smem:[#allocation8 + $0xb]]
        %v623 = vstv %s622
        %v624 = vmul.f32 %v276, %v623
        %v625 = vmul.f32 %v277, %v623
        %v628 = vrot.slane %v624, 2
        %v629 = vrot.slane %v625, 2
        %v630 = vsel %vm531, %v628, %v629
        %v633 = vadd.f32 %v620, %v630
        %v634 = vadd.f32 %v621, %v629
        %s635 = sld [smem:[#allocation8 + $0xc]]
        %v636 = vstv %s635
        %v637 = vmul.f32 %v278, %v636
        %v638 = vmul.f32 %v279, %v636
        %v639 = vadd.f32 %v633, %v637
        %v640 = vadd.f32 %v634, %v638
        %s641 = sld [smem:[#allocation8 + $0xd]]
        %v642 = vstv %s641
        %v643 = vmul.f32 %v278, %v642
        %v644 = vmul.f32 %v279, %v642
        %v647 = vrot.slane %v643, 1
        %v648 = vrot.slane %v644, 1
        %v649 = vsel %vm517, %v647, %v648
        %v652 = vadd.f32 %v639, %v649
        %v653 = vadd.f32 %v640, %v648
        %s654 = sld [smem:[#allocation8 + $0xe]]
        %v655 = vstv %s654
        %v656 = vmul.f32 %v278, %v655
        %v657 = vmul.f32 %v279, %v655
        %v660 = vrot.slane %v656, 2
        %v661 = vrot.slane %v657, 2
        %v662 = vsel %vm531, %v660, %v661
        %v665 = vadd.f32 %v652, %v662
        %v666 = vadd.f32 %v653, %v661
        %s667 = sld [smem:[#allocation8 + $0xf]]
        %v668 = vstv %s667
        %v669 = vmul.f32 %v280, %v668
        %v670 = vmul.f32 %v281, %v668
        %v671 = vadd.f32 %v665, %v669
        %v672 = vadd.f32 %v666, %v670
        %s673 = sld [smem:[#allocation8 + $0x10]]
        %v674 = vstv %s673
        %v675 = vmul.f32 %v280, %v674
        %v676 = vmul.f32 %v281, %v674
        %v679 = vrot.slane %v675, 1
        %v680 = vrot.slane %v676, 1
        %v681 = vsel %vm517, %v679, %v680
        %v684 = vadd.f32 %v671, %v681
        %v685 = vadd.f32 %v672, %v680
        %s686 = sld [smem:[#allocation8 + $0x11]]
        %v687 = vstv %s686
        %v688 = vmul.f32 %v280, %v687
        %v689 = vmul.f32 %v281, %v687
        %v692 = vrot.slane %v688, 2
        %v693 = vrot.slane %v689, 2
        %v694 = vsel %vm531, %v692, %v693
        %v697 = vadd.f32 %v684, %v694
        %v698 = vadd.f32 %v685, %v693
        %s699 = sld [smem:[#allocation8 + $0x12]]
        %v700 = vstv %s699
        %v701 = vmul.f32 %v282, %v700
        %v702 = vmul.f32 %v283, %v700
        %v703 = vadd.f32 %v697, %v701
        %v704 = vadd.f32 %v698, %v702
        %s705 = sld [smem:[#allocation8 + $0x13]]
        %v706 = vstv %s705
        %v707 = vmul.f32 %v282, %v706
        %v708 = vmul.f32 %v283, %v706
        %v711 = vrot.slane %v707, 1
        %v712 = vrot.slane %v708, 1
        %v713 = vsel %vm517, %v711, %v712
        %v716 = vadd.f32 %v703, %v713
        %v717 = vadd.f32 %v704, %v712
        %s718 = sld [smem:[#allocation8 + $0x14]]
        %v719 = vstv %s718
        %v720 = vmul.f32 %v282, %v719
        %v721 = vmul.f32 %v283, %v719
        %v724 = vrot.slane %v720, 2
        %v725 = vrot.slane %v721, 2
        %v726 = vsel %vm531, %v724, %v725
        %v729 = vadd.f32 %v716, %v726
        %v730 = vadd.f32 %v717, %v725
        %s731 = sld [smem:[#allocation8 + $0x15]]
        %v732 = vstv %s731
        %v733 = vmul.f32 %v284, %v732
        %v734 = vmul.f32 %v285, %v732
        %v735 = vadd.f32 %v729, %v733
        %v736 = vadd.f32 %v730, %v734
        %s737 = sld [smem:[#allocation8 + $0x16]]
        %v738 = vstv %s737
        %v739 = vmul.f32 %v284, %v738
        %v740 = vmul.f32 %v285, %v738
        %v743 = vrot.slane %v739, 1
        %v744 = vrot.slane %v740, 1
        %v745 = vsel %vm517, %v743, %v744
        %v748 = vadd.f32 %v735, %v745
        %v749 = vadd.f32 %v736, %v744
        %s750 = sld [smem:[#allocation8 + $0x17]]
        %v751 = vstv %s750
        %v752 = vmul.f32 %v284, %v751
        %v753 = vmul.f32 %v285, %v751
        %v756 = vrot.slane %v752, 2
        %v757 = vrot.slane %v753, 2
        %v758 = vsel %vm531, %v756, %v757
        %v761 = vadd.f32 %v748, %v758
        %v762 = vadd.f32 %v749, %v757
        %s763 = sld [smem:[#allocation8 + $0x18]]
        %v764 = vstv %s763
        %v765 = vmul.f32 %v286, %v764
        %v766 = vmul.f32 %v287, %v764
        %v767 = vadd.f32 %v761, %v765
        %v768 = vadd.f32 %v762, %v766
        %s769 = sld [smem:[#allocation8 + $0x19]]
        %v770 = vstv %s769
        %v771 = vmul.f32 %v286, %v770
        %v772 = vmul.f32 %v287, %v770
        %v775 = vrot.slane %v771, 1
        %v776 = vrot.slane %v772, 1
        %v777 = vsel %vm517, %v775, %v776
        %v780 = vadd.f32 %v767, %v777
        %v781 = vadd.f32 %v768, %v776
        %s782 = sld [smem:[#allocation8 + $0x1a]]
        %v783 = vstv %s782
        %v784 = vmul.f32 %v286, %v783
        %v785 = vmul.f32 %v287, %v783
        %v788 = vrot.slane %v784, 2
        %v789 = vrot.slane %v785, 2
        %v790 = vsel %vm531, %v788, %v789
        %v793 = vadd.f32 %v780, %v790
        %v794 = vadd.f32 %v781, %v789
        %s795 = sld [smem:[#allocation8 + $0x1b]]
        %v796 = vstv %s795
        %v797 = vmul.f32 %v288, %v796
        %v798 = vmul.f32 %v289, %v796
        %v799 = vadd.f32 %v793, %v797
        %v800 = vadd.f32 %v794, %v798
        %s801 = sld [smem:[#allocation8 + $0x1c]]
        %v802 = vstv %s801
        %v803 = vmul.f32 %v288, %v802
        %v804 = vmul.f32 %v289, %v802
        %v807 = vrot.slane %v803, 1
        %v808 = vrot.slane %v804, 1
        %v809 = vsel %vm517, %v807, %v808
        %v812 = vadd.f32 %v799, %v809
        %v813 = vadd.f32 %v800, %v808
        %s814 = sld [smem:[#allocation8 + $0x1d]]
        %v815 = vstv %s814
        %v816 = vmul.f32 %v288, %v815
        %v817 = vmul.f32 %v289, %v815
        %v820 = vrot.slane %v816, 2
        %v821 = vrot.slane %v817, 2
        %v822 = vsel %vm531, %v820, %v821
        %v825 = vadd.f32 %v812, %v822
        %v826 = vadd.f32 %v813, %v821
        %s827 = sld [smem:[#allocation8 + $0x1e]]
        %v828 = vstv %s827
        %v829 = vmul.f32 %v290, %v828
        %v830 = vmul.f32 %v291, %v828
        %v831 = vadd.f32 %v825, %v829
        %v832 = vadd.f32 %v826, %v830
        %s833 = sld [smem:[#allocation8 + $0x1f]]
        %v834 = vstv %s833
        %v835 = vmul.f32 %v290, %v834
        %v836 = vmul.f32 %v291, %v834
        %v839 = vrot.slane %v835, 1
        %v840 = vrot.slane %v836, 1
        %v841 = vsel %vm517, %v839, %v840
        %v844 = vadd.f32 %v831, %v841
        %v845 = vadd.f32 %v832, %v840
        %s846 = sld [smem:[#allocation8 + $0x20]]
        %v847 = vstv %s846
        %v848 = vmul.f32 %v290, %v847
        %v849 = vmul.f32 %v291, %v847
        %v852 = vrot.slane %v848, 2
        %v853 = vrot.slane %v849, 2
        %v854 = vsel %vm531, %v852, %v853
        %v857 = vadd.f32 %v844, %v854
        %v858 = vadd.f32 %v845, %v853
        %s859 = sld [smem:[#allocation8 + $0x2c]]
        %v860 = vstv %s859
        %v861 = vadd.f32 %v860, 0.0
        %s862 = sld [smem:[#allocation8 + $0x21]]
        %v863 = vstv %s862
        %v864 = vmul.f32 %v270, %v863
        %v865 = vmul.f32 %v271, %v863
        %v866 = vmul.f32 %v272, %v863
        %v867 = vmul.f32 %v273, %v863
        %v868 = vmul.f32 %v274, %v863
        %v869 = vmul.f32 %v275, %v863
        %v870 = vmul.f32 %v276, %v863
        %v871 = vmul.f32 %v277, %v863
        %v872 = vmul.f32 %v278, %v863
        %v873 = vmul.f32 %v279, %v863
        %v874 = vmul.f32 %v280, %v863
        %v875 = vmul.f32 %v281, %v863
        %v876 = vmul.f32 %v282, %v863
        %v877 = vmul.f32 %v283, %v863
        %v878 = vmul.f32 %v284, %v863
        %v879 = vmul.f32 %v285, %v863
        %v880 = vmul.f32 %v286, %v863
        %v881 = vmul.f32 %v287, %v863
        %v882 = vadd.f32 %v861, %v864
        %v883 = vadd.f32 %v861, %v865
        %v884 = vadd.f32 %v861, %v866
        %v885 = vadd.f32 %v861, %v867
        %v886 = vadd.f32 %v861, %v868
        %v887 = vadd.f32 %v861, %v869
        %v888 = vadd.f32 %v861, %v870
        %v889 = vadd.f32 %v861, %v871
        %v890 = vadd.f32 %v861, %v872
        %v891 = vadd.f32 %v861, %v873
        %v892 = vadd.f32 %v861, %v874
        %v893 = vadd.f32 %v861, %v875
        %v894 = vadd.f32 %v861, %v876
        %v895 = vadd.f32 %v861, %v877
        %v896 = vadd.f32 %v861, %v878
        %v897 = vadd.f32 %v861, %v879
        %v898 = vadd.f32 %v861, %v880
        %v899 = vadd.f32 %v861, %v881
        %s900 = sld [smem:[#allocation8 + $0x22]]
        %v901 = vstv %s900
        %v902 = vmul.f32 %v270, %v901
        %v903 = vmul.f32 %v271, %v901
        %v904 = vmul.f32 %v272, %v901
        %v905 = vmul.f32 %v273, %v901
        %v906 = vmul.f32 %v274, %v901
        %v907 = vmul.f32 %v275, %v901
        %v908 = vmul.f32 %v276, %v901
        %v909 = vmul.f32 %v277, %v901
        %v910 = vmul.f32 %v278, %v901
        %v911 = vmul.f32 %v279, %v901
        %v912 = vmul.f32 %v280, %v901
        %v913 = vmul.f32 %v281, %v901
        %v914 = vmul.f32 %v282, %v901
        %v915 = vmul.f32 %v283, %v901
        %v916 = vmul.f32 %v284, %v901
        %v917 = vmul.f32 %v285, %v901
        %v918 = vmul.f32 %v286, %v901
        %v919 = vmul.f32 %v287, %v901
        %v938 = vrot.slane %v902, 1
        %v939 = vrot.slane %v903, 1
        %v940 = vsel %vm517, %v938, %v939
        %v941 = vrot.slane %v904, 1
        %v942 = vrot.slane %v905, 1
        %v943 = vsel %vm517, %v941, %v942
        %v944 = vrot.slane %v906, 1
        %v945 = vrot.slane %v907, 1
        %v946 = vsel %vm517, %v944, %v945
        %v947 = vrot.slane %v908, 1
        %v948 = vrot.slane %v909, 1
        %v949 = vsel %vm517, %v947, %v948
        %v950 = vrot.slane %v910, 1
        %v951 = vrot.slane %v911, 1
        %v952 = vsel %vm517, %v950, %v951
        %v953 = vrot.slane %v912, 1
        %v954 = vrot.slane %v913, 1
        %v955 = vsel %vm517, %v953, %v954
        %v956 = vrot.slane %v914, 1
        %v957 = vrot.slane %v915, 1
        %v958 = vsel %vm517, %v956, %v957
        %v959 = vrot.slane %v916, 1
        %v960 = vrot.slane %v917, 1
        %v961 = vsel %vm517, %v959, %v960
        %v962 = vrot.slane %v918, 1
        %v963 = vrot.slane %v919, 1
        %v964 = vsel %vm517, %v962, %v963
        %v983 = vadd.f32 %v882, %v940
        %v984 = vadd.f32 %v883, %v939
        %v985 = vadd.f32 %v884, %v943
        %v986 = vadd.f32 %v885, %v942
        %v987 = vadd.f32 %v886, %v946
        %v988 = vadd.f32 %v887, %v945
        %v989 = vadd.f32 %v888, %v949
        %v990 = vadd.f32 %v889, %v948
        %v991 = vadd.f32 %v890, %v952
        %v992 = vadd.f32 %v891, %v951
        %v993 = vadd.f32 %v892, %v955
        %v994 = vadd.f32 %v893, %v954
        %v995 = vadd.f32 %v894, %v958
        %v996 = vadd.f32 %v895, %v957
        %v997 = vadd.f32 %v896, %v961
        %v998 = vadd.f32 %v897, %v960
        %v999 = vadd.f32 %v898, %v964
        %v1000 = vadd.f32 %v899, %v963
        %s1001 = sld [smem:[#allocation8 + $0x23]]
        %v1002 = vstv %s1001
        %v1003 = vmul.f32 %v270, %v1002
        %v1004 = vmul.f32 %v271, %v1002
        %v1005 = vmul.f32 %v272, %v1002
        %v1006 = vmul.f32 %v273, %v1002
        %v1007 = vmul.f32 %v274, %v1002
        %v1008 = vmul.f32 %v275, %v1002
        %v1009 = vmul.f32 %v276, %v1002
        %v1010 = vmul.f32 %v277, %v1002
        %v1011 = vmul.f32 %v278, %v1002
        %v1012 = vmul.f32 %v279, %v1002
        %v1013 = vmul.f32 %v280, %v1002
        %v1014 = vmul.f32 %v281, %v1002
        %v1015 = vmul.f32 %v282, %v1002
        %v1016 = vmul.f32 %v283, %v1002
        %v1017 = vmul.f32 %v284, %v1002
        %v1018 = vmul.f32 %v285, %v1002
        %v1019 = vmul.f32 %v286, %v1002
        %v1020 = vmul.f32 %v287, %v1002
        %v1039 = vrot.slane %v1003, 2
        %v1040 = vrot.slane %v1004, 2
        %v1041 = vsel %vm531, %v1039, %v1040
        %v1042 = vrot.slane %v1005, 2
        %v1043 = vrot.slane %v1006, 2
        %v1044 = vsel %vm531, %v1042, %v1043
        %v1045 = vrot.slane %v1007, 2
        %v1046 = vrot.slane %v1008, 2
        %v1047 = vsel %vm531, %v1045, %v1046
        %v1048 = vrot.slane %v1009, 2
        %v1049 = vrot.slane %v1010, 2
        %v1050 = vsel %vm531, %v1048, %v1049
        %v1051 = vrot.slane %v1011, 2
        %v1052 = vrot.slane %v1012, 2
        %v1053 = vsel %vm531, %v1051, %v1052
        %v1054 = vrot.slane %v1013, 2
        %v1055 = vrot.slane %v1014, 2
        %v1056 = vsel %vm531, %v1054, %v1055
        %v1057 = vrot.slane %v1015, 2
        %v1058 = vrot.slane %v1016, 2
        %v1059 = vsel %vm531, %v1057, %v1058
        %v1060 = vrot.slane %v1017, 2
        %v1061 = vrot.slane %v1018, 2
        %v1062 = vsel %vm531, %v1060, %v1061
        %v1063 = vrot.slane %v1019, 2
        %v1064 = vrot.slane %v1020, 2
        %v1065 = vsel %vm531, %v1063, %v1064
        %v1084 = vadd.f32 %v983, %v1041
        %v1085 = vadd.f32 %v984, %v1040
        %v1086 = vadd.f32 %v985, %v1044
        %v1087 = vadd.f32 %v986, %v1043
        %v1088 = vadd.f32 %v987, %v1047
        %v1089 = vadd.f32 %v988, %v1046
        %v1090 = vadd.f32 %v989, %v1050
        %v1091 = vadd.f32 %v990, %v1049
        %v1092 = vadd.f32 %v991, %v1053
        %v1093 = vadd.f32 %v992, %v1052
        %v1094 = vadd.f32 %v993, %v1056
        %v1095 = vadd.f32 %v994, %v1055
        %v1096 = vadd.f32 %v995, %v1059
        %v1097 = vadd.f32 %v996, %v1058
        %v1098 = vadd.f32 %v997, %v1062
        %v1099 = vadd.f32 %v998, %v1061
        %v1100 = vadd.f32 %v999, %v1065
        %v1101 = vadd.f32 %v1000, %v1064
        %s1102 = sld [smem:[#allocation8 + $0x24]]
        %v1103 = vstv %s1102
        %v1104 = vmul.f32 %v272, %v1103
        %v1105 = vmul.f32 %v273, %v1103
        %v1106 = vmul.f32 %v274, %v1103
        %v1107 = vmul.f32 %v275, %v1103
        %v1108 = vmul.f32 %v276, %v1103
        %v1109 = vmul.f32 %v277, %v1103
        %v1110 = vmul.f32 %v278, %v1103
        %v1111 = vmul.f32 %v279, %v1103
        %v1112 = vmul.f32 %v280, %v1103
        %v1113 = vmul.f32 %v281, %v1103
        %v1114 = vmul.f32 %v282, %v1103
        %v1115 = vmul.f32 %v283, %v1103
        %v1116 = vmul.f32 %v284, %v1103
        %v1117 = vmul.f32 %v285, %v1103
        %v1118 = vmul.f32 %v286, %v1103
        %v1119 = vmul.f32 %v287, %v1103
        %v1120 = vmul.f32 %v288, %v1103
        %v1121 = vmul.f32 %v289, %v1103
        %v1122 = vadd.f32 %v1084, %v1104
        %v1123 = vadd.f32 %v1085, %v1105
        %v1124 = vadd.f32 %v1086, %v1106
        %v1125 = vadd.f32 %v1087, %v1107
        %v1126 = vadd.f32 %v1088, %v1108
        %v1127 = vadd.f32 %v1089, %v1109
        %v1128 = vadd.f32 %v1090, %v1110
        %v1129 = vadd.f32 %v1091, %v1111
        %v1130 = vadd.f32 %v1092, %v1112
        %v1131 = vadd.f32 %v1093, %v1113
        %v1132 = vadd.f32 %v1094, %v1114
        %v1133 = vadd.f32 %v1095, %v1115
        %v1134 = vadd.f32 %v1096, %v1116
        %v1135 = vadd.f32 %v1097, %v1117
        %v1136 = vadd.f32 %v1098, %v1118
        %v1137 = vadd.f32 %v1099, %v1119
        %v1138 = vadd.f32 %v1100, %v1120
        %v1139 = vadd.f32 %v1101, %v1121
        %s1140 = sld [smem:[#allocation8 + $0x25]]
        %v1141 = vstv %s1140
        %v1142 = vmul.f32 %v272, %v1141
        %v1143 = vmul.f32 %v273, %v1141
        %v1144 = vmul.f32 %v274, %v1141
        %v1145 = vmul.f32 %v275, %v1141
        %v1146 = vmul.f32 %v276, %v1141
        %v1147 = vmul.f32 %v277, %v1141
        %v1148 = vmul.f32 %v278, %v1141
        %v1149 = vmul.f32 %v279, %v1141
        %v1150 = vmul.f32 %v280, %v1141
        %v1151 = vmul.f32 %v281, %v1141
        %v1152 = vmul.f32 %v282, %v1141
        %v1153 = vmul.f32 %v283, %v1141
        %v1154 = vmul.f32 %v284, %v1141
        %v1155 = vmul.f32 %v285, %v1141
        %v1156 = vmul.f32 %v286, %v1141
        %v1157 = vmul.f32 %v287, %v1141
        %v1158 = vmul.f32 %v288, %v1141
        %v1159 = vmul.f32 %v289, %v1141
        %v1178 = vrot.slane %v1142, 1
        %v1179 = vrot.slane %v1143, 1
        %v1180 = vsel %vm517, %v1178, %v1179
        %v1181 = vrot.slane %v1144, 1
        %v1182 = vrot.slane %v1145, 1
        %v1183 = vsel %vm517, %v1181, %v1182
        %v1184 = vrot.slane %v1146, 1
        %v1185 = vrot.slane %v1147, 1
        %v1186 = vsel %vm517, %v1184, %v1185
        %v1187 = vrot.slane %v1148, 1
        %v1188 = vrot.slane %v1149, 1
        %v1189 = vsel %vm517, %v1187, %v1188
        %v1190 = vrot.slane %v1150, 1
        %v1191 = vrot.slane %v1151, 1
        %v1192 = vsel %vm517, %v1190, %v1191
        %v1193 = vrot.slane %v1152, 1
        %v1194 = vrot.slane %v1153, 1
        %v1195 = vsel %vm517, %v1193, %v1194
        %v1196 = vrot.slane %v1154, 1
        %v1197 = vrot.slane %v1155, 1
        %v1198 = vsel %vm517, %v1196, %v1197
        %v1199 = vrot.slane %v1156, 1
        %v1200 = vrot.slane %v1157, 1
        %v1201 = vsel %vm517, %v1199, %v1200
        %v1202 = vrot.slane %v1158, 1
        %v1203 = vrot.slane %v1159, 1
        %v1204 = vsel %vm517, %v1202, %v1203
        %v1223 = vadd.f32 %v1122, %v1180
        %v1224 = vadd.f32 %v1123, %v1179
        %v1225 = vadd.f32 %v1124, %v1183
        %v1226 = vadd.f32 %v1125, %v1182
        %v1227 = vadd.f32 %v1126, %v1186
        %v1228 = vadd.f32 %v1127, %v1185
        %v1229 = vadd.f32 %v1128, %v1189
        %v1230 = vadd.f32 %v1129, %v1188
        %v1231 = vadd.f32 %v1130, %v1192
        %v1232 = vadd.f32 %v1131, %v1191
        %v1233 = vadd.f32 %v1132, %v1195
        %v1234 = vadd.f32 %v1133, %v1194
        %v1235 = vadd.f32 %v1134, %v1198
        %v1236 = vadd.f32 %v1135, %v1197
        %v1237 = vadd.f32 %v1136, %v1201
        %v1238 = vadd.f32 %v1137, %v1200
        %v1239 = vadd.f32 %v1138, %v1204
        %v1240 = vadd.f32 %v1139, %v1203
        %s1241 = sld [smem:[#allocation8 + $0x26]]
        %v1242 = vstv %s1241
        %v1243 = vmul.f32 %v272, %v1242
        %v1244 = vmul.f32 %v273, %v1242
        %v1245 = vmul.f32 %v274, %v1242
        %v1246 = vmul.f32 %v275, %v1242
        %v1247 = vmul.f32 %v276, %v1242
        %v1248 = vmul.f32 %v277, %v1242
        %v1249 = vmul.f32 %v278, %v1242
        %v1250 = vmul.f32 %v279, %v1242
        %v1251 = vmul.f32 %v280, %v1242
        %v1252 = vmul.f32 %v281, %v1242
        %v1253 = vmul.f32 %v282, %v1242
        %v1254 = vmul.f32 %v283, %v1242
        %v1255 = vmul.f32 %v284, %v1242
        %v1256 = vmul.f32 %v285, %v1242
        %v1257 = vmul.f32 %v286, %v1242
        %v1258 = vmul.f32 %v287, %v1242
        %v1259 = vmul.f32 %v288, %v1242
        %v1260 = vmul.f32 %v289, %v1242
        %v1279 = vrot.slane %v1243, 2
        %v1280 = vrot.slane %v1244, 2
        %v1281 = vsel %vm531, %v1279, %v1280
        %v1282 = vrot.slane %v1245, 2
        %v1283 = vrot.slane %v1246, 2
        %v1284 = vsel %vm531, %v1282, %v1283
        %v1285 = vrot.slane %v1247, 2
        %v1286 = vrot.slane %v1248, 2
        %v1287 = vsel %vm531, %v1285, %v1286
        %v1288 = vrot.slane %v1249, 2
        %v1289 = vrot.slane %v1250, 2
        %v1290 = vsel %vm531, %v1288, %v1289
        %v1291 = vrot.slane %v1251, 2
        %v1292 = vrot.slane %v1252, 2
        %v1293 = vsel %vm531, %v1291, %v1292
        %v1294 = vrot.slane %v1253, 2
        %v1295 = vrot.slane %v1254, 2
        %v1296 = vsel %vm531, %v1294, %v1295
        %v1297 = vrot.slane %v1255, 2
        %v1298 = vrot.slane %v1256, 2
        %v1299 = vsel %vm531, %v1297, %v1298
        %v1300 = vrot.slane %v1257, 2
        %v1301 = vrot.slane %v1258, 2
        %v1302 = vsel %vm531, %v1300, %v1301
        %v1303 = vrot.slane %v1259, 2
        %v1304 = vrot.slane %v1260, 2
        %v1305 = vsel %vm531, %v1303, %v1304
        %v1324 = vadd.f32 %v1223, %v1281
        %v1325 = vadd.f32 %v1224, %v1280
        %v1326 = vadd.f32 %v1225, %v1284
        %v1327 = vadd.f32 %v1226, %v1283
        %v1328 = vadd.f32 %v1227, %v1287
        %v1329 = vadd.f32 %v1228, %v1286
        %v1330 = vadd.f32 %v1229, %v1290
        %v1331 = vadd.f32 %v1230, %v1289
        %v1332 = vadd.f32 %v1231, %v1293
        %v1333 = vadd.f32 %v1232, %v1292
        %v1334 = vadd.f32 %v1233, %v1296
        %v1335 = vadd.f32 %v1234, %v1295
        %v1336 = vadd.f32 %v1235, %v1299
        %v1337 = vadd.f32 %v1236, %v1298
        %v1338 = vadd.f32 %v1237, %v1302
        %v1339 = vadd.f32 %v1238, %v1301
        %v1340 = vadd.f32 %v1239, %v1305
        %v1341 = vadd.f32 %v1240, %v1304
        %s1342 = sld [smem:[#allocation8 + $0x27]]
        %v1343 = vstv %s1342
        %v1344 = vmul.f32 %v274, %v1343
        %v1345 = vmul.f32 %v275, %v1343
        %v1346 = vmul.f32 %v276, %v1343
        %v1347 = vmul.f32 %v277, %v1343
        %v1348 = vmul.f32 %v278, %v1343
        %v1349 = vmul.f32 %v279, %v1343
        %v1350 = vmul.f32 %v280, %v1343
        %v1351 = vmul.f32 %v281, %v1343
        %v1352 = vmul.f32 %v282, %v1343
        %v1353 = vmul.f32 %v283, %v1343
        %v1354 = vmul.f32 %v284, %v1343
        %v1355 = vmul.f32 %v285, %v1343
        %v1356 = vmul.f32 %v286, %v1343
        %v1357 = vmul.f32 %v287, %v1343
        %v1358 = vmul.f32 %v288, %v1343
        %v1359 = vmul.f32 %v289, %v1343
        %v1360 = vmul.f32 %v290, %v1343
        %v1361 = vmul.f32 %v291, %v1343
        %v1362 = vadd.f32 %v1324, %v1344
        %v1363 = vadd.f32 %v1325, %v1345
        %v1364 = vadd.f32 %v1326, %v1346
        %v1365 = vadd.f32 %v1327, %v1347
        %v1366 = vadd.f32 %v1328, %v1348
        %v1367 = vadd.f32 %v1329, %v1349
        %v1368 = vadd.f32 %v1330, %v1350
        %v1369 = vadd.f32 %v1331, %v1351
        %v1370 = vadd.f32 %v1332, %v1352
        %v1371 = vadd.f32 %v1333, %v1353
        %v1372 = vadd.f32 %v1334, %v1354
        %v1373 = vadd.f32 %v1335, %v1355
        %v1374 = vadd.f32 %v1336, %v1356
        %v1375 = vadd.f32 %v1337, %v1357
        %v1376 = vadd.f32 %v1338, %v1358
        %v1377 = vadd.f32 %v1339, %v1359
        %v1378 = vadd.f32 %v1340, %v1360
        %v1379 = vadd.f32 %v1341, %v1361
        %s1380 = sld [smem:[#allocation8 + $0x28]]
        %v1381 = vstv %s1380
        %v1382 = vmul.f32 %v274, %v1381
        %v1383 = vmul.f32 %v275, %v1381
        %v1384 = vmul.f32 %v276, %v1381
        %v1385 = vmul.f32 %v277, %v1381
        %v1386 = vmul.f32 %v278, %v1381
        %v1387 = vmul.f32 %v279, %v1381
        %v1388 = vmul.f32 %v280, %v1381
        %v1389 = vmul.f32 %v281, %v1381
        %v1390 = vmul.f32 %v282, %v1381
        %v1391 = vmul.f32 %v283, %v1381
        %v1392 = vmul.f32 %v284, %v1381
        %v1393 = vmul.f32 %v285, %v1381
        %v1394 = vmul.f32 %v286, %v1381
        %v1395 = vmul.f32 %v287, %v1381
        %v1396 = vmul.f32 %v288, %v1381
        %v1397 = vmul.f32 %v289, %v1381
        %v1398 = vmul.f32 %v290, %v1381
        %v1399 = vmul.f32 %v291, %v1381
        %v1418 = vrot.slane %v1382, 1
        %v1419 = vrot.slane %v1383, 1
        %v1420 = vsel %vm517, %v1418, %v1419
        %v1421 = vrot.slane %v1384, 1
        %v1422 = vrot.slane %v1385, 1
        %v1423 = vsel %vm517, %v1421, %v1422
        %v1424 = vrot.slane %v1386, 1
        %v1425 = vrot.slane %v1387, 1
        %v1426 = vsel %vm517, %v1424, %v1425
        %v1427 = vrot.slane %v1388, 1
        %v1428 = vrot.slane %v1389, 1
        %v1429 = vsel %vm517, %v1427, %v1428
        %v1430 = vrot.slane %v1390, 1
        %v1431 = vrot.slane %v1391, 1
        %v1432 = vsel %vm517, %v1430, %v1431
        %v1433 = vrot.slane %v1392, 1
        %v1434 = vrot.slane %v1393, 1
        %v1435 = vsel %vm517, %v1433, %v1434
        %v1436 = vrot.slane %v1394, 1
        %v1437 = vrot.slane %v1395, 1
        %v1438 = vsel %vm517, %v1436, %v1437
        %v1439 = vrot.slane %v1396, 1
        %v1440 = vrot.slane %v1397, 1
        %v1441 = vsel %vm517, %v1439, %v1440
        %v1442 = vrot.slane %v1398, 1
        %v1443 = vrot.slane %v1399, 1
        %v1444 = vsel %vm517, %v1442, %v1443
        %v1463 = vadd.f32 %v1362, %v1420
        %v1464 = vadd.f32 %v1363, %v1419
        %v1465 = vadd.f32 %v1364, %v1423
        %v1466 = vadd.f32 %v1365, %v1422
        %v1467 = vadd.f32 %v1366, %v1426
        %v1468 = vadd.f32 %v1367, %v1425
        %v1469 = vadd.f32 %v1368, %v1429
        %v1470 = vadd.f32 %v1369, %v1428
        %v1471 = vadd.f32 %v1370, %v1432
        %v1472 = vadd.f32 %v1371, %v1431
        %v1473 = vadd.f32 %v1372, %v1435
        %v1474 = vadd.f32 %v1373, %v1434
        %v1475 = vadd.f32 %v1374, %v1438
        %v1476 = vadd.f32 %v1375, %v1437
        %v1477 = vadd.f32 %v1376, %v1441
        %v1478 = vadd.f32 %v1377, %v1440
        %v1479 = vadd.f32 %v1378, %v1444
        %v1480 = vadd.f32 %v1379, %v1443
        %s1481 = sld [smem:[#allocation8 + $0x29]]
        %v1482 = vstv %s1481
        %v1483 = vmul.f32 %v274, %v1482
        %v1484 = vmul.f32 %v275, %v1482
        %v1485 = vmul.f32 %v276, %v1482
        %v1486 = vmul.f32 %v277, %v1482
        %v1487 = vmul.f32 %v278, %v1482
        %v1488 = vmul.f32 %v279, %v1482
        %v1489 = vmul.f32 %v280, %v1482
        %v1490 = vmul.f32 %v281, %v1482
        %v1491 = vmul.f32 %v282, %v1482
        %v1492 = vmul.f32 %v283, %v1482
        %v1493 = vmul.f32 %v284, %v1482
        %v1494 = vmul.f32 %v285, %v1482
        %v1495 = vmul.f32 %v286, %v1482
        %v1496 = vmul.f32 %v287, %v1482
        %v1497 = vmul.f32 %v288, %v1482
        %v1498 = vmul.f32 %v289, %v1482
        %v1499 = vmul.f32 %v290, %v1482
        %v1500 = vmul.f32 %v291, %v1482
        %v1519 = vrot.slane %v1483, 2
        %v1520 = vrot.slane %v1484, 2
        %v1521 = vsel %vm531, %v1519, %v1520
        %v1522 = vrot.slane %v1485, 2
        %v1523 = vrot.slane %v1486, 2
        %v1524 = vsel %vm531, %v1522, %v1523
        %v1525 = vrot.slane %v1487, 2
        %v1526 = vrot.slane %v1488, 2
        %v1527 = vsel %vm531, %v1525, %v1526
        %v1528 = vrot.slane %v1489, 2
        %v1529 = vrot.slane %v1490, 2
        %v1530 = vsel %vm531, %v1528, %v1529
        %v1531 = vrot.slane %v1491, 2
        %v1532 = vrot.slane %v1492, 2
        %v1533 = vsel %vm531, %v1531, %v1532
        %v1534 = vrot.slane %v1493, 2
        %v1535 = vrot.slane %v1494, 2
        %v1536 = vsel %vm531, %v1534, %v1535
        %v1537 = vrot.slane %v1495, 2
        %v1538 = vrot.slane %v1496, 2
        %v1539 = vsel %vm531, %v1537, %v1538
        %v1540 = vrot.slane %v1497, 2
        %v1541 = vrot.slane %v1498, 2
        %v1542 = vsel %vm531, %v1540, %v1541
        %v1543 = vrot.slane %v1499, 2
        %v1544 = vrot.slane %v1500, 2
        %v1545 = vsel %vm531, %v1543, %v1544
        %v1564 = vadd.f32 %v1463, %v1521
        %v1565 = vadd.f32 %v1464, %v1520
        %v1566 = vadd.f32 %v1465, %v1524
        %v1567 = vadd.f32 %v1466, %v1523
        %v1568 = vadd.f32 %v1467, %v1527
        %v1569 = vadd.f32 %v1468, %v1526
        %v1570 = vadd.f32 %v1469, %v1530
        %v1571 = vadd.f32 %v1470, %v1529
        %v1572 = vadd.f32 %v1471, %v1533
        %v1573 = vadd.f32 %v1472, %v1532
        %v1574 = vadd.f32 %v1473, %v1536
        %v1575 = vadd.f32 %v1474, %v1535
        %v1576 = vadd.f32 %v1475, %v1539
        %v1577 = vadd.f32 %v1476, %v1538
        %v1578 = vadd.f32 %v1477, %v1542
        %v1579 = vadd.f32 %v1478, %v1541
        %v1580 = vadd.f32 %v1479, %v1545
        %v1581 = vadd.f32 %v1480, %v1544
        %v1582 = vld [vmem:[%s2] sm:$0xff]
        %v1583 = vld [vmem:[%s2 + $0x8] sm:$0x3]
        %vm1593 = vcmask 1041409
        %v1594 = vsel %vm1593, %v494, %v493
        %vm1595 = vcmask 1042434
        %v1596 = vsel %vm1595, %v495, %v1594
        %vm1597 = vcmask 1043459
        %v1598 = vsel %vm1597, %v496, %v1596
        %vm1599 = vcmask 1044484
        %v1600 = vsel %vm1599, %v497, %v1598
        %vm1601 = vcmask 1045509
        %v1602 = vsel %vm1601, %v498, %v1600
        %vm1603 = vcmask 1046534
        %v1604 = vsel %vm1603, %v499, %v1602
        %vm1605 = vcmask 1047559
        %v1606 = vsel %vm1605, %v500, %v1604
        %vm1608 = vcmask 72704
        %v1610 = vsel %vm1608, %v1582, 0
        %v1613 = vsel %vm1608, %v1583, 0
        %vm1615 = vcmask 1040384
        %v1616 = vsel %vm1615, %v501, 0
        %1618 = vmatprep.subr.mxu0 0.0
        %1619 = vmatpush1.msra.mxu0 0.0
        %1620 = vmatprep.subr.mxu0 0.0
        %1621 = vmatpush1.msra.mxu0 0.0
        %1622 = vmatprep.subr.mxu0 0.0
        %1623 = vmatpush1.msra.mxu0 0.0
        %1624 = vmatprep.subr.mxu0 0.0
        %1625 = vmatpush1.msra.mxu0 0.0
        %1626 = vmatprep.subr.mxu0 0.0
        %1627 = vmatpush1.msra.mxu0 0.0
        %1628 = vmatprep.subr.mxu0 0.0
        %1629 = vmatpush1.msra.mxu0 0.0
        %1630 = vmatprep.subr.mxu0 0.0
        %1631 = vmatpush1.msra.mxu0 0.0
        %1632 = vmatprep.subr.mxu0 0.0
        %1633 = vmatpush1.msra.mxu0 0.0
        %1634 = vmatprep.subr.mxu0 0.0
        %1635 = vmatpush1.msra.mxu0 0.0
        %1636 = vmatprep.subr.mxu0 0.0
        %1637 = vmatpush1.msra.mxu0 0.0
        %1638 = vmatprep.subr.mxu0 0.0
        %1639 = vmatpush1.msra.mxu0 0.0
        %1640 = vmatprep.subr.mxu0 0.0
        %1641 = vmatpush1.msra.mxu0 0.0
        %1642 = vmatprep.subr.mxu0 0.0
        %1643 = vmatpush1.msra.mxu0 0.0
        %1644 = vmatprep.subr.mxu0 0.0
        %1645 = vmatpush1.msra.mxu0 0.0
        %1646 = vmatprep.subr.mxu0 0.0
        %1647 = vmatpush1.msra.mxu0 %v1616
        %1648 = vmatprep.subr.mxu0 0.0
        %1649 = vmatpush1.msra.mxu0 %v1606
        %1650 = vmatprep.subr.mxu0 0.0
        %1651 = vmatpush2.msra.mxu0 0.0
        %1652 = vmatprep.subr.mxu0 0.0
        %1653 = vmatpush2.msra.mxu0 0.0
        %1654 = vmatprep.subr.mxu0 0.0
        %1655 = vmatpush2.msra.mxu0 0.0
        %1656 = vmatprep.subr.mxu0 0.0
        %1657 = vmatpush2.msra.mxu0 0.0
        %1658 = vmatprep.subr.mxu0 0.0
        %1659 = vmatpush2.msra.mxu0 0.0
        %1660 = vmatprep.subr.mxu0 0.0
        %1661 = vmatpush2.msra.mxu0 0.0
        %1662 = vmatprep.subr.mxu0 0.0
        %1663 = vmatpush2.msra.mxu0 0.0
        %1664 = vmatprep.subr.mxu0 0.0
        %1665 = vmatpush2.msra.mxu0 0.0
        %1666 = vmatprep.subr.mxu0 0.0
        %1667 = vmatpush2.msra.mxu0 0.0
        %1668 = vmatprep.subr.mxu0 0.0
        %1669 = vmatpush2.msra.mxu0 0.0
        %1670 = vmatprep.subr.mxu0 0.0
        %1671 = vmatpush2.msra.mxu0 0.0
        %1672 = vmatprep.subr.mxu0 0.0
        %1673 = vmatpush2.msra.mxu0 0.0
        %1674 = vmatprep.subr.mxu0 0.0
        %1675 = vmatpush2.msra.mxu0 0.0
        %1676 = vmatprep.subr.mxu0 0.0
        %1677 = vmatpush2.msra.mxu0 0.0
        %1678 = vmatprep.subr.mxu0 0.0
        %1679 = vmatpush2.msra.mxu0 0.0
        %1680 = vmatprep.subr.mxu0 0.0
        %1681 = vmatpush2.msra.mxu0 0.0
        %1682 = vmatprep.mubr.f32.mxu0 0.0
        %1683 = vmatmul.mubr.f32.gmra.mxu0 %v1610
        %v1684 = vpop.f32.mrf.mxu0
        %v1685 = vadd.f32 0.0, %v1684
        %v1686 = vpop.f32.mrf.mxu0
        %1687 = vmatprep.mubr.f32.mxu0 0.0
        %1688 = vmatmul.mubr.f32.gmra.mxu0 %v1613
        %v1689 = vpop.f32.mrf.mxu0
        %v1690 = vadd.f32 0.0, %v1689
        %v1691 = vpop.f32.mrf.mxu0
        %1692 = vdwg.mxu0
        %1693 = vset.pattern.permute.xlu0 18
        %1694 = vperm.xlu0 %1693, %v1582
        %v1695 = vpop.permute.xlu0 %1694
        %1697 = vset.pattern.permute.xlu0 18
        %1698 = vperm.xlu0 %1697, %v1583
        %v1699 = vpop.permute.xlu0 %1698
        %v1701 = vadd.f32 %v1695, %v1685
        %v1702 = vadd.f32 %v1699, %v1690
        %1703 = vrot.lane.b32.xlu0 %v1582, 119
        %v1704 = vpop.permute.xlu0 %1703
        %1705 = vrot.lane.b32.xlu0 %v1583, 119
        %v1706 = vpop.permute.xlu0 %1705
        %v1707 = vsel %vm1608, %v1704, 0
        %v1709 = vsel %vm1608, %v1706, 0
        %v1712 = vsel %vm1615, %v858, 0
        %1714 = vmatprep.subr.mxu0 0.0
        %1715 = vmatpush1.msra.mxu0 0.0
        %1716 = vmatprep.subr.mxu0 0.0
        %1717 = vmatpush1.msra.mxu0 0.0
        %1718 = vmatprep.subr.mxu0 0.0
        %1719 = vmatpush1.msra.mxu0 0.0
        %1720 = vmatprep.subr.mxu0 0.0
        %1721 = vmatpush1.msra.mxu0 0.0
        %1722 = vmatprep.subr.mxu0 0.0
        %1723 = vmatpush1.msra.mxu0 0.0
        %1724 = vmatprep.subr.mxu0 0.0
        %1725 = vmatpush1.msra.mxu0 0.0
        %1726 = vmatprep.subr.mxu0 0.0
        %1727 = vmatpush1.msra.mxu0 0.0
        %1728 = vmatprep.subr.mxu0 0.0
        %1729 = vmatpush1.msra.mxu0 0.0
        %1730 = vmatprep.subr.mxu0 0.0
        %1731 = vmatpush1.msra.mxu0 0.0
        %1732 = vmatprep.subr.mxu0 0.0
        %1733 = vmatpush1.msra.mxu0 0.0
        %1734 = vmatprep.subr.mxu0 0.0
        %1735 = vmatpush1.msra.mxu0 0.0
        %1736 = vmatprep.subr.mxu0 0.0
        %1737 = vmatpush1.msra.mxu0 0.0
        %1738 = vmatprep.subr.mxu0 0.0
        %1739 = vmatpush1.msra.mxu0 0.0
        %1740 = vmatprep.subr.mxu0 0.0
        %1741 = vmatpush1.msra.mxu0 0.0
        %1742 = vmatprep.subr.mxu0 0.0
        %1743 = vmatpush1.msra.mxu0 %v1712
        %1744 = vmatprep.subr.mxu0 0.0
        %1745 = vmatpush1.msra.mxu0 %v857
        %1746 = vmatprep.subr.mxu0 0.0
        %1747 = vmatpush2.msra.mxu0 0.0
        %1748 = vmatprep.subr.mxu0 0.0
        %1749 = vmatpush2.msra.mxu0 0.0
        %1750 = vmatprep.subr.mxu0 0.0
        %1751 = vmatpush2.msra.mxu0 0.0
        %1752 = vmatprep.subr.mxu0 0.0
        %1753 = vmatpush2.msra.mxu0 0.0
        %1754 = vmatprep.subr.mxu0 0.0
        %1755 = vmatpush2.msra.mxu0 0.0
        %1756 = vmatprep.subr.mxu0 0.0
        %1757 = vmatpush2.msra.mxu0 0.0
        %1758 = vmatprep.subr.mxu0 0.0
        %1759 = vmatpush2.msra.mxu0 0.0
        %1760 = vmatprep.subr.mxu0 0.0
        %1761 = vmatpush2.msra.mxu0 0.0
        %1762 = vmatprep.subr.mxu0 0.0
        %1763 = vmatpush2.msra.mxu0 0.0
        %1764 = vmatprep.subr.mxu0 0.0
        %1765 = vmatpush2.msra.mxu0 0.0
        %1766 = vmatprep.subr.mxu0 0.0
        %1767 = vmatpush2.msra.mxu0 0.0
        %1768 = vmatprep.subr.mxu0 0.0
        %1769 = vmatpush2.msra.mxu0 0.0
        %1770 = vmatprep.subr.mxu0 0.0
        %1771 = vmatpush2.msra.mxu0 0.0
        %1772 = vmatprep.subr.mxu0 0.0
        %1773 = vmatpush2.msra.mxu0 0.0
        %1774 = vmatprep.subr.mxu0 0.0
        %1775 = vmatpush2.msra.mxu0 0.0
        %1776 = vmatprep.subr.mxu0 0.0
        %1777 = vmatpush2.msra.mxu0 0.0
        %1778 = vmatprep.mubr.f32.mxu0 0.0
        %1779 = vmatmul.mubr.f32.gmra.mxu0 %v1707
        %v1780 = vpop.f32.mrf.mxu0
        %v1781 = vadd.f32 0.0, %v1780
        %v1782 = vpop.f32.mrf.mxu0
        %1783 = vmatprep.mubr.f32.mxu0 0.0
        %1784 = vmatmul.mubr.f32.gmra.mxu0 %v1709
        %v1785 = vpop.f32.mrf.mxu0
        %v1786 = vadd.f32 0.0, %v1785
        %v1787 = vpop.f32.mrf.mxu0
        %1788 = vdwg.mxu0
        %v1789 = vadd.f32 %v1701, %v1781
        %v1790 = vadd.f32 %v1702, %v1786
        %v1791 = vld [vmem:[#allocation6] sm:$0xff]
        %v1792 = vld [vmem:[#allocation6 + $0x8] sm:$0x3]
        %v1793 = vld [vmem:[#allocation6 + $0x10] sm:$0xff]
        %v1794 = vld [vmem:[#allocation6 + $0x18] sm:$0x3]
        %v1795 = vld [vmem:[#allocation6 + $0x20] sm:$0xff]
        %v1796 = vld [vmem:[#allocation6 + $0x28] sm:$0x3]
        %v1797 = vld [vmem:[#allocation6 + $0x30] sm:$0xff]
        %v1798 = vld [vmem:[#allocation6 + $0x38] sm:$0x3]
        %v1799 = vld [vmem:[#allocation6 + $0x40] sm:$0xff]
        %v1800 = vld [vmem:[#allocation6 + $0x48] sm:$0x3]
        %v1801 = vld [vmem:[#allocation6 + $0x50] sm:$0xff]
        %v1802 = vld [vmem:[#allocation6 + $0x58] sm:$0x3]
        %v1803 = vld [vmem:[#allocation6 + $0x60] sm:$0xff]
        %v1804 = vld [vmem:[#allocation6 + $0x68] sm:$0x3]
        %v1805 = vld [vmem:[#allocation6 + $0x70] sm:$0xff]
        %v1806 = vld [vmem:[#allocation6 + $0x78] sm:$0x3]
        %v1807 = vld [vmem:[#allocation6 + $0x80] sm:$0xff]
        %v1808 = vld [vmem:[#allocation6 + $0x88] sm:$0x3]
        %v1810 = vsel %vm1608, %v1791, 0
        %v1813 = vsel %vm1608, %v1792, 0
        %v1816 = vsel %vm1615, %v1565, 0
        %1818 = vmatprep.subr.mxu0 0.0
        %1819 = vmatpush1.msra.mxu0 0.0
        %1820 = vmatprep.subr.mxu0 0.0
        %1821 = vmatpush1.msra.mxu0 0.0
        %1822 = vmatprep.subr.mxu0 0.0
        %1823 = vmatpush1.msra.mxu0 0.0
        %1824 = vmatprep.subr.mxu0 0.0
        %1825 = vmatpush1.msra.mxu0 0.0
        %1826 = vmatprep.subr.mxu0 0.0
        %1827 = vmatpush1.msra.mxu0 0.0
        %1828 = vmatprep.subr.mxu0 0.0
        %1829 = vmatpush1.msra.mxu0 0.0
        %1830 = vmatprep.subr.mxu0 0.0
        %1831 = vmatpush1.msra.mxu0 0.0
        %1832 = vmatprep.subr.mxu0 0.0
        %1833 = vmatpush1.msra.mxu0 0.0
        %1834 = vmatprep.subr.mxu0 0.0
        %1835 = vmatpush1.msra.mxu0 0.0
        %1836 = vmatprep.subr.mxu0 0.0
        %1837 = vmatpush1.msra.mxu0 0.0
        %1838 = vmatprep.subr.mxu0 0.0
        %1839 = vmatpush1.msra.mxu0 0.0
        %1840 = vmatprep.subr.mxu0 0.0
        %1841 = vmatpush1.msra.mxu0 0.0
        %1842 = vmatprep.subr.mxu0 0.0
        %1843 = vmatpush1.msra.mxu0 0.0
        %1844 = vmatprep.subr.mxu0 0.0
        %1845 = vmatpush1.msra.mxu0 0.0
        %1846 = vmatprep.subr.mxu0 0.0
        %1847 = vmatpush1.msra.mxu0 %v1816
        %1848 = vmatprep.subr.mxu0 0.0
        %1849 = vmatpush1.msra.mxu0 %v1564
        %1850 = vmatprep.subr.mxu0 0.0
        %1851 = vmatpush2.msra.mxu0 0.0
        %1852 = vmatprep.subr.mxu0 0.0
        %1853 = vmatpush2.msra.mxu0 0.0
        %1854 = vmatprep.subr.mxu0 0.0
        %1855 = vmatpush2.msra.mxu0 0.0
        %1856 = vmatprep.subr.mxu0 0.0
        %1857 = vmatpush2.msra.mxu0 0.0
        %1858 = vmatprep.subr.mxu0 0.0
        %1859 = vmatpush2.msra.mxu0 0.0
        %1860 = vmatprep.subr.mxu0 0.0
        %1861 = vmatpush2.msra.mxu0 0.0
        %1862 = vmatprep.subr.mxu0 0.0
        %1863 = vmatpush2.msra.mxu0 0.0
        %1864 = vmatprep.subr.mxu0 0.0
        %1865 = vmatpush2.msra.mxu0 0.0
        %1866 = vmatprep.subr.mxu0 0.0
        %1867 = vmatpush2.msra.mxu0 0.0
        %1868 = vmatprep.subr.mxu0 0.0
        %1869 = vmatpush2.msra.mxu0 0.0
        %1870 = vmatprep.subr.mxu0 0.0
        %1871 = vmatpush2.msra.mxu0 0.0
        %1872 = vmatprep.subr.mxu0 0.0
        %1873 = vmatpush2.msra.mxu0 0.0
        %1874 = vmatprep.subr.mxu0 0.0
        %1875 = vmatpush2.msra.mxu0 0.0
        %1876 = vmatprep.subr.mxu0 0.0
        %1877 = vmatpush2.msra.mxu0 0.0
        %1878 = vmatprep.subr.mxu0 0.0
        %1879 = vmatpush2.msra.mxu0 0.0
        %1880 = vmatprep.subr.mxu0 0.0
        %1881 = vmatpush2.msra.mxu0 0.0
        %1882 = vmatprep.mubr.f32.mxu0 0.0
        %1883 = vmatmul.mubr.f32.gmra.mxu0 %v1810
        %v1884 = vpop.f32.mrf.mxu0
        %v1885 = vadd.f32 0.0, %v1884
        %v1886 = vpop.f32.mrf.mxu0
        %1887 = vmatprep.mubr.f32.mxu0 0.0
        %1888 = vmatmul.mubr.f32.gmra.mxu0 %v1813
        %v1889 = vpop.f32.mrf.mxu0
        %v1890 = vadd.f32 0.0, %v1889
        %v1891 = vpop.f32.mrf.mxu0
        %1892 = vdwg.mxu0
        %v1894 = vsel %vm1608, %v1793, 0
        %v1897 = vsel %vm1608, %v1794, 0
        %v1900 = vsel %vm1615, %v1567, 0
        %1902 = vmatprep.subr.mxu0 0.0
        %1903 = vmatpush1.msra.mxu0 0.0
        %1904 = vmatprep.subr.mxu0 0.0
        %1905 = vmatpush1.msra.mxu0 0.0
        %1906 = vmatprep.subr.mxu0 0.0
        %1907 = vmatpush1.msra.mxu0 0.0
        %1908 = vmatprep.subr.mxu0 0.0
        %1909 = vmatpush1.msra.mxu0 0.0
        %1910 = vmatprep.subr.mxu0 0.0
        %1911 = vmatpush1.msra.mxu0 0.0
        %1912 = vmatprep.subr.mxu0 0.0
        %1913 = vmatpush1.msra.mxu0 0.0
        %1914 = vmatprep.subr.mxu0 0.0
        %1915 = vmatpush1.msra.mxu0 0.0
        %1916 = vmatprep.subr.mxu0 0.0
        %1917 = vmatpush1.msra.mxu0 0.0
        %1918 = vmatprep.subr.mxu0 0.0
        %1919 = vmatpush1.msra.mxu0 0.0
        %1920 = vmatprep.subr.mxu0 0.0
        %1921 = vmatpush1.msra.mxu0 0.0
        %1922 = vmatprep.subr.mxu0 0.0
        %1923 = vmatpush1.msra.mxu0 0.0
        %1924 = vmatprep.subr.mxu0 0.0
        %1925 = vmatpush1.msra.mxu0 0.0
        %1926 = vmatprep.subr.mxu0 0.0
        %1927 = vmatpush1.msra.mxu0 0.0
        %1928 = vmatprep.subr.mxu0 0.0
        %1929 = vmatpush1.msra.mxu0 0.0
        %1930 = vmatprep.subr.mxu0 0.0
        %1931 = vmatpush1.msra.mxu0 %v1900
        %1932 = vmatprep.subr.mxu0 0.0
        %1933 = vmatpush1.msra.mxu0 %v1566
        %1934 = vmatprep.subr.mxu0 0.0
        %1935 = vmatpush2.msra.mxu0 0.0
        %1936 = vmatprep.subr.mxu0 0.0
        %1937 = vmatpush2.msra.mxu0 0.0
        %1938 = vmatprep.subr.mxu0 0.0
        %1939 = vmatpush2.msra.mxu0 0.0
        %1940 = vmatprep.subr.mxu0 0.0
        %1941 = vmatpush2.msra.mxu0 0.0
        %1942 = vmatprep.subr.mxu0 0.0
        %1943 = vmatpush2.msra.mxu0 0.0
        %1944 = vmatprep.subr.mxu0 0.0
        %1945 = vmatpush2.msra.mxu0 0.0
        %1946 = vmatprep.subr.mxu0 0.0
        %1947 = vmatpush2.msra.mxu0 0.0
        %1948 = vmatprep.subr.mxu0 0.0
        %1949 = vmatpush2.msra.mxu0 0.0
        %1950 = vmatprep.subr.mxu0 0.0
        %1951 = vmatpush2.msra.mxu0 0.0
        %1952 = vmatprep.subr.mxu0 0.0
        %1953 = vmatpush2.msra.mxu0 0.0
        %1954 = vmatprep.subr.mxu0 0.0
        %1955 = vmatpush2.msra.mxu0 0.0
        %1956 = vmatprep.subr.mxu0 0.0
        %1957 = vmatpush2.msra.mxu0 0.0
        %1958 = vmatprep.subr.mxu0 0.0
        %1959 = vmatpush2.msra.mxu0 0.0
        %1960 = vmatprep.subr.mxu0 0.0
        %1961 = vmatpush2.msra.mxu0 0.0
        %1962 = vmatprep.subr.mxu0 0.0
        %1963 = vmatpush2.msra.mxu0 0.0
        %1964 = vmatprep.subr.mxu0 0.0
        %1965 = vmatpush2.msra.mxu0 0.0
        %1966 = vmatprep.mubr.f32.mxu0 0.0
        %1967 = vmatmul.mubr.f32.gmra.mxu0 %v1894
        %v1968 = vpop.f32.mrf.mxu0
        %v1969 = vadd.f32 0.0, %v1968
        %v1970 = vpop.f32.mrf.mxu0
        %1971 = vmatprep.mubr.f32.mxu0 0.0
        %1972 = vmatmul.mubr.f32.gmra.mxu0 %v1897
        %v1973 = vpop.f32.mrf.mxu0
        %v1974 = vadd.f32 0.0, %v1973
        %v1975 = vpop.f32.mrf.mxu0
        %1976 = vdwg.mxu0
        %v1978 = vsel %vm1608, %v1795, 0
        %v1981 = vsel %vm1608, %v1796, 0
        %v1984 = vsel %vm1615, %v1569, 0
        %1986 = vmatprep.subr.mxu0 0.0
        %1987 = vmatpush1.msra.mxu0 0.0
        %1988 = vmatprep.subr.mxu0 0.0
        %1989 = vmatpush1.msra.mxu0 0.0
        %1990 = vmatprep.subr.mxu0 0.0
        %1991 = vmatpush1.msra.mxu0 0.0
        %1992 = vmatprep.subr.mxu0 0.0
        %1993 = vmatpush1.msra.mxu0 0.0
        %1994 = vmatprep.subr.mxu0 0.0
        %1995 = vmatpush1.msra.mxu0 0.0
        %1996 = vmatprep.subr.mxu0 0.0
        %1997 = vmatpush1.msra.mxu0 0.0
        %1998 = vmatprep.subr.mxu0 0.0
        %1999 = vmatpush1.msra.mxu0 0.0
        %2000 = vmatprep.subr.mxu0 0.0
        %2001 = vmatpush1.msra.mxu0 0.0
        %2002 = vmatprep.subr.mxu0 0.0
        %2003 = vmatpush1.msra.mxu0 0.0
        %2004 = vmatprep.subr.mxu0 0.0
        %2005 = vmatpush1.msra.mxu0 0.0
        %2006 = vmatprep.subr.mxu0 0.0
        %2007 = vmatpush1.msra.mxu0 0.0
        %2008 = vmatprep.subr.mxu0 0.0
        %2009 = vmatpush1.msra.mxu0 0.0
        %2010 = vmatprep.subr.mxu0 0.0
        %2011 = vmatpush1.msra.mxu0 0.0
        %2012 = vmatprep.subr.mxu0 0.0
        %2013 = vmatpush1.msra.mxu0 0.0
        %2014 = vmatprep.subr.mxu0 0.0
        %2015 = vmatpush1.msra.mxu0 %v1984
        %2016 = vmatprep.subr.mxu0 0.0
        %2017 = vmatpush1.msra.mxu0 %v1568
        %2018 = vmatprep.subr.mxu0 0.0
        %2019 = vmatpush2.msra.mxu0 0.0
        %2020 = vmatprep.subr.mxu0 0.0
        %2021 = vmatpush2.msra.mxu0 0.0
        %2022 = vmatprep.subr.mxu0 0.0
        %2023 = vmatpush2.msra.mxu0 0.0
        %2024 = vmatprep.subr.mxu0 0.0
        %2025 = vmatpush2.msra.mxu0 0.0
        %2026 = vmatprep.subr.mxu0 0.0
        %2027 = vmatpush2.msra.mxu0 0.0
        %2028 = vmatprep.subr.mxu0 0.0
        %2029 = vmatpush2.msra.mxu0 0.0
        %2030 = vmatprep.subr.mxu0 0.0
        %2031 = vmatpush2.msra.mxu0 0.0
        %2032 = vmatprep.subr.mxu0 0.0
        %2033 = vmatpush2.msra.mxu0 0.0
        %2034 = vmatprep.subr.mxu0 0.0
        %2035 = vmatpush2.msra.mxu0 0.0
        %2036 = vmatprep.subr.mxu0 0.0
        %2037 = vmatpush2.msra.mxu0 0.0
        %2038 = vmatprep.subr.mxu0 0.0
        %2039 = vmatpush2.msra.mxu0 0.0
        %2040 = vmatprep.subr.mxu0 0.0
        %2041 = vmatpush2.msra.mxu0 0.0
        %2042 = vmatprep.subr.mxu0 0.0
        %2043 = vmatpush2.msra.mxu0 0.0
        %2044 = vmatprep.subr.mxu0 0.0
        %2045 = vmatpush2.msra.mxu0 0.0
        %2046 = vmatprep.subr.mxu0 0.0
        %2047 = vmatpush2.msra.mxu0 0.0
        %2048 = vmatprep.subr.mxu0 0.0
        %2049 = vmatpush2.msra.mxu0 0.0
        %2050 = vmatprep.mubr.f32.mxu0 0.0
        %2051 = vmatmul.mubr.f32.gmra.mxu0 %v1978
        %v2052 = vpop.f32.mrf.mxu0
        %v2053 = vadd.f32 0.0, %v2052
        %v2054 = vpop.f32.mrf.mxu0
        %2055 = vmatprep.mubr.f32.mxu0 0.0
        %2056 = vmatmul.mubr.f32.gmra.mxu0 %v1981
        %v2057 = vpop.f32.mrf.mxu0
        %v2058 = vadd.f32 0.0, %v2057
        %v2059 = vpop.f32.mrf.mxu0
        %2060 = vdwg.mxu0
        %v2062 = vsel %vm1608, %v1797, 0
        %v2065 = vsel %vm1608, %v1798, 0
        %v2068 = vsel %vm1615, %v1571, 0
        %2070 = vmatprep.subr.mxu0 0.0
        %2071 = vmatpush1.msra.mxu0 0.0
        %2072 = vmatprep.subr.mxu0 0.0
        %2073 = vmatpush1.msra.mxu0 0.0
        %2074 = vmatprep.subr.mxu0 0.0
        %2075 = vmatpush1.msra.mxu0 0.0
        %2076 = vmatprep.subr.mxu0 0.0
        %2077 = vmatpush1.msra.mxu0 0.0
        %2078 = vmatprep.subr.mxu0 0.0
        %2079 = vmatpush1.msra.mxu0 0.0
        %2080 = vmatprep.subr.mxu0 0.0
        %2081 = vmatpush1.msra.mxu0 0.0
        %2082 = vmatprep.subr.mxu0 0.0
        %2083 = vmatpush1.msra.mxu0 0.0
        %2084 = vmatprep.subr.mxu0 0.0
        %2085 = vmatpush1.msra.mxu0 0.0
        %2086 = vmatprep.subr.mxu0 0.0
        %2087 = vmatpush1.msra.mxu0 0.0
        %2088 = vmatprep.subr.mxu0 0.0
        %2089 = vmatpush1.msra.mxu0 0.0
        %2090 = vmatprep.subr.mxu0 0.0
        %2091 = vmatpush1.msra.mxu0 0.0
        %2092 = vmatprep.subr.mxu0 0.0
        %2093 = vmatpush1.msra.mxu0 0.0
        %2094 = vmatprep.subr.mxu0 0.0
        %2095 = vmatpush1.msra.mxu0 0.0
        %2096 = vmatprep.subr.mxu0 0.0
        %2097 = vmatpush1.msra.mxu0 0.0
        %2098 = vmatprep.subr.mxu0 0.0
        %2099 = vmatpush1.msra.mxu0 %v2068
        %2100 = vmatprep.subr.mxu0 0.0
        %2101 = vmatpush1.msra.mxu0 %v1570
        %2102 = vmatprep.subr.mxu0 0.0
        %2103 = vmatpush2.msra.mxu0 0.0
        %2104 = vmatprep.subr.mxu0 0.0
        %2105 = vmatpush2.msra.mxu0 0.0
        %2106 = vmatprep.subr.mxu0 0.0
        %2107 = vmatpush2.msra.mxu0 0.0
        %2108 = vmatprep.subr.mxu0 0.0
        %2109 = vmatpush2.msra.mxu0 0.0
        %2110 = vmatprep.subr.mxu0 0.0
        %2111 = vmatpush2.msra.mxu0 0.0
        %2112 = vmatprep.subr.mxu0 0.0
        %2113 = vmatpush2.msra.mxu0 0.0
        %2114 = vmatprep.subr.mxu0 0.0
        %2115 = vmatpush2.msra.mxu0 0.0
        %2116 = vmatprep.subr.mxu0 0.0
        %2117 = vmatpush2.msra.mxu0 0.0
        %2118 = vmatprep.subr.mxu0 0.0
        %2119 = vmatpush2.msra.mxu0 0.0
        %2120 = vmatprep.subr.mxu0 0.0
        %2121 = vmatpush2.msra.mxu0 0.0
        %2122 = vmatprep.subr.mxu0 0.0
        %2123 = vmatpush2.msra.mxu0 0.0
        %2124 = vmatprep.subr.mxu0 0.0
        %2125 = vmatpush2.msra.mxu0 0.0
        %2126 = vmatprep.subr.mxu0 0.0
        %2127 = vmatpush2.msra.mxu0 0.0
        %2128 = vmatprep.subr.mxu0 0.0
        %2129 = vmatpush2.msra.mxu0 0.0
        %2130 = vmatprep.subr.mxu0 0.0
        %2131 = vmatpush2.msra.mxu0 0.0
        %2132 = vmatprep.subr.mxu0 0.0
        %2133 = vmatpush2.msra.mxu0 0.0
        %2134 = vmatprep.mubr.f32.mxu0 0.0
        %2135 = vmatmul.mubr.f32.gmra.mxu0 %v2062
        %v2136 = vpop.f32.mrf.mxu0
        %v2137 = vadd.f32 0.0, %v2136
        %v2138 = vpop.f32.mrf.mxu0
        %2139 = vmatprep.mubr.f32.mxu0 0.0
        %2140 = vmatmul.mubr.f32.gmra.mxu0 %v2065
        %v2141 = vpop.f32.mrf.mxu0
        %v2142 = vadd.f32 0.0, %v2141
        %v2143 = vpop.f32.mrf.mxu0
        %2144 = vdwg.mxu0
        %v2146 = vsel %vm1608, %v1799, 0
        %v2149 = vsel %vm1608, %v1800, 0
        %v2152 = vsel %vm1615, %v1573, 0
        %2154 = vmatprep.subr.mxu0 0.0
        %2155 = vmatpush1.msra.mxu0 0.0
        %2156 = vmatprep.subr.mxu0 0.0
        %2157 = vmatpush1.msra.mxu0 0.0
        %2158 = vmatprep.subr.mxu0 0.0
        %2159 = vmatpush1.msra.mxu0 0.0
        %2160 = vmatprep.subr.mxu0 0.0
        %2161 = vmatpush1.msra.mxu0 0.0
        %2162 = vmatprep.subr.mxu0 0.0
        %2163 = vmatpush1.msra.mxu0 0.0
        %2164 = vmatprep.subr.mxu0 0.0
        %2165 = vmatpush1.msra.mxu0 0.0
        %2166 = vmatprep.subr.mxu0 0.0
        %2167 = vmatpush1.msra.mxu0 0.0
        %2168 = vmatprep.subr.mxu0 0.0
        %2169 = vmatpush1.msra.mxu0 0.0
        %2170 = vmatprep.subr.mxu0 0.0
        %2171 = vmatpush1.msra.mxu0 0.0
        %2172 = vmatprep.subr.mxu0 0.0
        %2173 = vmatpush1.msra.mxu0 0.0
        %2174 = vmatprep.subr.mxu0 0.0
        %2175 = vmatpush1.msra.mxu0 0.0
        %2176 = vmatprep.subr.mxu0 0.0
        %2177 = vmatpush1.msra.mxu0 0.0
        %2178 = vmatprep.subr.mxu0 0.0
        %2179 = vmatpush1.msra.mxu0 0.0
        %2180 = vmatprep.subr.mxu0 0.0
        %2181 = vmatpush1.msra.mxu0 0.0
        %2182 = vmatprep.subr.mxu0 0.0
        %2183 = vmatpush1.msra.mxu0 %v2152
        %2184 = vmatprep.subr.mxu0 0.0
        %2185 = vmatpush1.msra.mxu0 %v1572
        %2186 = vmatprep.subr.mxu0 0.0
        %2187 = vmatpush2.msra.mxu0 0.0
        %2188 = vmatprep.subr.mxu0 0.0
        %2189 = vmatpush2.msra.mxu0 0.0
        %2190 = vmatprep.subr.mxu0 0.0
        %2191 = vmatpush2.msra.mxu0 0.0
        %2192 = vmatprep.subr.mxu0 0.0
        %2193 = vmatpush2.msra.mxu0 0.0
        %2194 = vmatprep.subr.mxu0 0.0
        %2195 = vmatpush2.msra.mxu0 0.0
        %2196 = vmatprep.subr.mxu0 0.0
        %2197 = vmatpush2.msra.mxu0 0.0
        %2198 = vmatprep.subr.mxu0 0.0
        %2199 = vmatpush2.msra.mxu0 0.0
        %2200 = vmatprep.subr.mxu0 0.0
        %2201 = vmatpush2.msra.mxu0 0.0
        %2202 = vmatprep.subr.mxu0 0.0
        %2203 = vmatpush2.msra.mxu0 0.0
        %2204 = vmatprep.subr.mxu0 0.0
        %2205 = vmatpush2.msra.mxu0 0.0
        %2206 = vmatprep.subr.mxu0 0.0
        %2207 = vmatpush2.msra.mxu0 0.0
        %2208 = vmatprep.subr.mxu0 0.0
        %2209 = vmatpush2.msra.mxu0 0.0
        %2210 = vmatprep.subr.mxu0 0.0
        %2211 = vmatpush2.msra.mxu0 0.0
        %2212 = vmatprep.subr.mxu0 0.0
        %2213 = vmatpush2.msra.mxu0 0.0
        %2214 = vmatprep.subr.mxu0 0.0
        %2215 = vmatpush2.msra.mxu0 0.0
        %2216 = vmatprep.subr.mxu0 0.0
        %2217 = vmatpush2.msra.mxu0 0.0
        %2218 = vmatprep.mubr.f32.mxu0 0.0
        %2219 = vmatmul.mubr.f32.gmra.mxu0 %v2146
        %v2220 = vpop.f32.mrf.mxu0
        %v2221 = vadd.f32 0.0, %v2220
        %v2222 = vpop.f32.mrf.mxu0
        %2223 = vmatprep.mubr.f32.mxu0 0.0
        %2224 = vmatmul.mubr.f32.gmra.mxu0 %v2149
        %v2225 = vpop.f32.mrf.mxu0
        %v2226 = vadd.f32 0.0, %v2225
        %v2227 = vpop.f32.mrf.mxu0
        %2228 = vdwg.mxu0
        %v2230 = vsel %vm1608, %v1801, 0
        %v2233 = vsel %vm1608, %v1802, 0
        %v2236 = vsel %vm1615, %v1575, 0
        %2238 = vmatprep.subr.mxu0 0.0
        %2239 = vmatpush1.msra.mxu0 0.0
        %2240 = vmatprep.subr.mxu0 0.0
        %2241 = vmatpush1.msra.mxu0 0.0
        %2242 = vmatprep.subr.mxu0 0.0
        %2243 = vmatpush1.msra.mxu0 0.0
        %2244 = vmatprep.subr.mxu0 0.0
        %2245 = vmatpush1.msra.mxu0 0.0
        %2246 = vmatprep.subr.mxu0 0.0
        %2247 = vmatpush1.msra.mxu0 0.0
        %2248 = vmatprep.subr.mxu0 0.0
        %2249 = vmatpush1.msra.mxu0 0.0
        %2250 = vmatprep.subr.mxu0 0.0
        %2251 = vmatpush1.msra.mxu0 0.0
        %2252 = vmatprep.subr.mxu0 0.0
        %2253 = vmatpush1.msra.mxu0 0.0
        %2254 = vmatprep.subr.mxu0 0.0
        %2255 = vmatpush1.msra.mxu0 0.0
        %2256 = vmatprep.subr.mxu0 0.0
        %2257 = vmatpush1.msra.mxu0 0.0
        %2258 = vmatprep.subr.mxu0 0.0
        %2259 = vmatpush1.msra.mxu0 0.0
        %2260 = vmatprep.subr.mxu0 0.0
        %2261 = vmatpush1.msra.mxu0 0.0
        %2262 = vmatprep.subr.mxu0 0.0
        %2263 = vmatpush1.msra.mxu0 0.0
        %2264 = vmatprep.subr.mxu0 0.0
        %2265 = vmatpush1.msra.mxu0 0.0
        %2266 = vmatprep.subr.mxu0 0.0
        %2267 = vmatpush1.msra.mxu0 %v2236
        %2268 = vmatprep.subr.mxu0 0.0
        %2269 = vmatpush1.msra.mxu0 %v1574
        %2270 = vmatprep.subr.mxu0 0.0
        %2271 = vmatpush2.msra.mxu0 0.0
        %2272 = vmatprep.subr.mxu0 0.0
        %2273 = vmatpush2.msra.mxu0 0.0
        %2274 = vmatprep.subr.mxu0 0.0
        %2275 = vmatpush2.msra.mxu0 0.0
        %2276 = vmatprep.subr.mxu0 0.0
        %2277 = vmatpush2.msra.mxu0 0.0
        %2278 = vmatprep.subr.mxu0 0.0
        %2279 = vmatpush2.msra.mxu0 0.0
        %2280 = vmatprep.subr.mxu0 0.0
        %2281 = vmatpush2.msra.mxu0 0.0
        %2282 = vmatprep.subr.mxu0 0.0
        %2283 = vmatpush2.msra.mxu0 0.0
        %2284 = vmatprep.subr.mxu0 0.0
        %2285 = vmatpush2.msra.mxu0 0.0
        %2286 = vmatprep.subr.mxu0 0.0
        %2287 = vmatpush2.msra.mxu0 0.0
        %2288 = vmatprep.subr.mxu0 0.0
        %2289 = vmatpush2.msra.mxu0 0.0
        %2290 = vmatprep.subr.mxu0 0.0
        %2291 = vmatpush2.msra.mxu0 0.0
        %2292 = vmatprep.subr.mxu0 0.0
        %2293 = vmatpush2.msra.mxu0 0.0
        %2294 = vmatprep.subr.mxu0 0.0
        %2295 = vmatpush2.msra.mxu0 0.0
        %2296 = vmatprep.subr.mxu0 0.0
        %2297 = vmatpush2.msra.mxu0 0.0
        %2298 = vmatprep.subr.mxu0 0.0
        %2299 = vmatpush2.msra.mxu0 0.0
        %2300 = vmatprep.subr.mxu0 0.0
        %2301 = vmatpush2.msra.mxu0 0.0
        %2302 = vmatprep.mubr.f32.mxu0 0.0
        %2303 = vmatmul.mubr.f32.gmra.mxu0 %v2230
        %v2304 = vpop.f32.mrf.mxu0
        %v2305 = vadd.f32 0.0, %v2304
        %v2306 = vpop.f32.mrf.mxu0
        %2307 = vmatprep.mubr.f32.mxu0 0.0
        %2308 = vmatmul.mubr.f32.gmra.mxu0 %v2233
        %v2309 = vpop.f32.mrf.mxu0
        %v2310 = vadd.f32 0.0, %v2309
        %v2311 = vpop.f32.mrf.mxu0
        %2312 = vdwg.mxu0
        %v2314 = vsel %vm1608, %v1803, 0
        %v2317 = vsel %vm1608, %v1804, 0
        %v2320 = vsel %vm1615, %v1577, 0
        %2322 = vmatprep.subr.mxu0 0.0
        %2323 = vmatpush1.msra.mxu0 0.0
        %2324 = vmatprep.subr.mxu0 0.0
        %2325 = vmatpush1.msra.mxu0 0.0
        %2326 = vmatprep.subr.mxu0 0.0
        %2327 = vmatpush1.msra.mxu0 0.0
        %2328 = vmatprep.subr.mxu0 0.0
        %2329 = vmatpush1.msra.mxu0 0.0
        %2330 = vmatprep.subr.mxu0 0.0
        %2331 = vmatpush1.msra.mxu0 0.0
        %2332 = vmatprep.subr.mxu0 0.0
        %2333 = vmatpush1.msra.mxu0 0.0
        %2334 = vmatprep.subr.mxu0 0.0
        %2335 = vmatpush1.msra.mxu0 0.0
        %2336 = vmatprep.subr.mxu0 0.0
        %2337 = vmatpush1.msra.mxu0 0.0
        %2338 = vmatprep.subr.mxu0 0.0
        %2339 = vmatpush1.msra.mxu0 0.0
        %2340 = vmatprep.subr.mxu0 0.0
        %2341 = vmatpush1.msra.mxu0 0.0
        %2342 = vmatprep.subr.mxu0 0.0
        %2343 = vmatpush1.msra.mxu0 0.0
        %2344 = vmatprep.subr.mxu0 0.0
        %2345 = vmatpush1.msra.mxu0 0.0
        %2346 = vmatprep.subr.mxu0 0.0
        %2347 = vmatpush1.msra.mxu0 0.0
        %2348 = vmatprep.subr.mxu0 0.0
        %2349 = vmatpush1.msra.mxu0 0.0
        %2350 = vmatprep.subr.mxu0 0.0
        %2351 = vmatpush1.msra.mxu0 %v2320
        %2352 = vmatprep.subr.mxu0 0.0
        %2353 = vmatpush1.msra.mxu0 %v1576
        %2354 = vmatprep.subr.mxu0 0.0
        %2355 = vmatpush2.msra.mxu0 0.0
        %2356 = vmatprep.subr.mxu0 0.0
        %2357 = vmatpush2.msra.mxu0 0.0
        %2358 = vmatprep.subr.mxu0 0.0
        %2359 = vmatpush2.msra.mxu0 0.0
        %2360 = vmatprep.subr.mxu0 0.0
        %2361 = vmatpush2.msra.mxu0 0.0
        %2362 = vmatprep.subr.mxu0 0.0
        %2363 = vmatpush2.msra.mxu0 0.0
        %2364 = vmatprep.subr.mxu0 0.0
        %2365 = vmatpush2.msra.mxu0 0.0
        %2366 = vmatprep.subr.mxu0 0.0
        %2367 = vmatpush2.msra.mxu0 0.0
        %2368 = vmatprep.subr.mxu0 0.0
        %2369 = vmatpush2.msra.mxu0 0.0
        %2370 = vmatprep.subr.mxu0 0.0
        %2371 = vmatpush2.msra.mxu0 0.0
        %2372 = vmatprep.subr.mxu0 0.0
        %2373 = vmatpush2.msra.mxu0 0.0
        %2374 = vmatprep.subr.mxu0 0.0
        %2375 = vmatpush2.msra.mxu0 0.0
        %2376 = vmatprep.subr.mxu0 0.0
        %2377 = vmatpush2.msra.mxu0 0.0
        %2378 = vmatprep.subr.mxu0 0.0
        %2379 = vmatpush2.msra.mxu0 0.0
        %2380 = vmatprep.subr.mxu0 0.0
        %2381 = vmatpush2.msra.mxu0 0.0
        %2382 = vmatprep.subr.mxu0 0.0
        %2383 = vmatpush2.msra.mxu0 0.0
        %2384 = vmatprep.subr.mxu0 0.0
        %2385 = vmatpush2.msra.mxu0 0.0
        %2386 = vmatprep.mubr.f32.mxu0 0.0
        %2387 = vmatmul.mubr.f32.gmra.mxu0 %v2314
        %v2388 = vpop.f32.mrf.mxu0
        %v2389 = vadd.f32 0.0, %v2388
        %v2390 = vpop.f32.mrf.mxu0
        %2391 = vmatprep.mubr.f32.mxu0 0.0
        %2392 = vmatmul.mubr.f32.gmra.mxu0 %v2317
        %v2393 = vpop.f32.mrf.mxu0
        %v2394 = vadd.f32 0.0, %v2393
        %v2395 = vpop.f32.mrf.mxu0
        %2396 = vdwg.mxu0
        %v2398 = vsel %vm1608, %v1805, 0
        %v2401 = vsel %vm1608, %v1806, 0
        %v2404 = vsel %vm1615, %v1579, 0
        %2406 = vmatprep.subr.mxu0 0.0
        %2407 = vmatpush1.msra.mxu0 0.0
        %2408 = vmatprep.subr.mxu0 0.0
        %2409 = vmatpush1.msra.mxu0 0.0
        %2410 = vmatprep.subr.mxu0 0.0
        %2411 = vmatpush1.msra.mxu0 0.0
        %2412 = vmatprep.subr.mxu0 0.0
        %2413 = vmatpush1.msra.mxu0 0.0
        %2414 = vmatprep.subr.mxu0 0.0
        %2415 = vmatpush1.msra.mxu0 0.0
        %2416 = vmatprep.subr.mxu0 0.0
        %2417 = vmatpush1.msra.mxu0 0.0
        %2418 = vmatprep.subr.mxu0 0.0
        %2419 = vmatpush1.msra.mxu0 0.0
        %2420 = vmatprep.subr.mxu0 0.0
        %2421 = vmatpush1.msra.mxu0 0.0
        %2422 = vmatprep.subr.mxu0 0.0
        %2423 = vmatpush1.msra.mxu0 0.0
        %2424 = vmatprep.subr.mxu0 0.0
        %2425 = vmatpush1.msra.mxu0 0.0
        %2426 = vmatprep.subr.mxu0 0.0
        %2427 = vmatpush1.msra.mxu0 0.0
        %2428 = vmatprep.subr.mxu0 0.0
        %2429 = vmatpush1.msra.mxu0 0.0
        %2430 = vmatprep.subr.mxu0 0.0
        %2431 = vmatpush1.msra.mxu0 0.0
        %2432 = vmatprep.subr.mxu0 0.0
        %2433 = vmatpush1.msra.mxu0 0.0
        %2434 = vmatprep.subr.mxu0 0.0
        %2435 = vmatpush1.msra.mxu0 %v2404
        %2436 = vmatprep.subr.mxu0 0.0
        %2437 = vmatpush1.msra.mxu0 %v1578
        %2438 = vmatprep.subr.mxu0 0.0
        %2439 = vmatpush2.msra.mxu0 0.0
        %2440 = vmatprep.subr.mxu0 0.0
        %2441 = vmatpush2.msra.mxu0 0.0
        %2442 = vmatprep.subr.mxu0 0.0
        %2443 = vmatpush2.msra.mxu0 0.0
        %2444 = vmatprep.subr.mxu0 0.0
        %2445 = vmatpush2.msra.mxu0 0.0
        %2446 = vmatprep.subr.mxu0 0.0
        %2447 = vmatpush2.msra.mxu0 0.0
        %2448 = vmatprep.subr.mxu0 0.0
        %2449 = vmatpush2.msra.mxu0 0.0
        %2450 = vmatprep.subr.mxu0 0.0
        %2451 = vmatpush2.msra.mxu0 0.0
        %2452 = vmatprep.subr.mxu0 0.0
        %2453 = vmatpush2.msra.mxu0 0.0
        %2454 = vmatprep.subr.mxu0 0.0
        %2455 = vmatpush2.msra.mxu0 0.0
        %2456 = vmatprep.subr.mxu0 0.0
        %2457 = vmatpush2.msra.mxu0 0.0
        %2458 = vmatprep.subr.mxu0 0.0
        %2459 = vmatpush2.msra.mxu0 0.0
        %2460 = vmatprep.subr.mxu0 0.0
        %2461 = vmatpush2.msra.mxu0 0.0
        %2462 = vmatprep.subr.mxu0 0.0
        %2463 = vmatpush2.msra.mxu0 0.0
        %2464 = vmatprep.subr.mxu0 0.0
        %2465 = vmatpush2.msra.mxu0 0.0
        %2466 = vmatprep.subr.mxu0 0.0
        %2467 = vmatpush2.msra.mxu0 0.0
        %2468 = vmatprep.subr.mxu0 0.0
        %2469 = vmatpush2.msra.mxu0 0.0
        %2470 = vmatprep.mubr.f32.mxu0 0.0
        %2471 = vmatmul.mubr.f32.gmra.mxu0 %v2398
        %v2472 = vpop.f32.mrf.mxu0
        %v2473 = vadd.f32 0.0, %v2472
        %v2474 = vpop.f32.mrf.mxu0
        %2475 = vmatprep.mubr.f32.mxu0 0.0
        %2476 = vmatmul.mubr.f32.gmra.mxu0 %v2401
        %v2477 = vpop.f32.mrf.mxu0
        %v2478 = vadd.f32 0.0, %v2477
        %v2479 = vpop.f32.mrf.mxu0
        %2480 = vdwg.mxu0
        %v2482 = vsel %vm1608, %v1807, 0
        %v2485 = vsel %vm1608, %v1808, 0
        %v2488 = vsel %vm1615, %v1581, 0
        %2490 = vmatprep.subr.mxu0 0.0
        %2491 = vmatpush1.msra.mxu0 0.0
        %2492 = vmatprep.subr.mxu0 0.0
        %2493 = vmatpush1.msra.mxu0 0.0
        %2494 = vmatprep.subr.mxu0 0.0
        %2495 = vmatpush1.msra.mxu0 0.0
        %2496 = vmatprep.subr.mxu0 0.0
        %2497 = vmatpush1.msra.mxu0 0.0
        %2498 = vmatprep.subr.mxu0 0.0
        %2499 = vmatpush1.msra.mxu0 0.0
        %2500 = vmatprep.subr.mxu0 0.0
        %2501 = vmatpush1.msra.mxu0 0.0
        %2502 = vmatprep.subr.mxu0 0.0
        %2503 = vmatpush1.msra.mxu0 0.0
        %2504 = vmatprep.subr.mxu0 0.0
        %2505 = vmatpush1.msra.mxu0 0.0
        %2506 = vmatprep.subr.mxu0 0.0
        %2507 = vmatpush1.msra.mxu0 0.0
        %2508 = vmatprep.subr.mxu0 0.0
        %2509 = vmatpush1.msra.mxu0 0.0
        %2510 = vmatprep.subr.mxu0 0.0
        %2511 = vmatpush1.msra.mxu0 0.0
        %2512 = vmatprep.subr.mxu0 0.0
        %2513 = vmatpush1.msra.mxu0 0.0
        %2514 = vmatprep.subr.mxu0 0.0
        %2515 = vmatpush1.msra.mxu0 0.0
        %2516 = vmatprep.subr.mxu0 0.0
        %2517 = vmatpush1.msra.mxu0 0.0
        %2518 = vmatprep.subr.mxu0 0.0
        %2519 = vmatpush1.msra.mxu0 %v2488
        %2520 = vmatprep.subr.mxu0 0.0
        %2521 = vmatpush1.msra.mxu0 %v1580
        %2522 = vmatprep.subr.mxu0 0.0
        %2523 = vmatpush2.msra.mxu0 0.0
        %2524 = vmatprep.subr.mxu0 0.0
        %2525 = vmatpush2.msra.mxu0 0.0
        %2526 = vmatprep.subr.mxu0 0.0
        %2527 = vmatpush2.msra.mxu0 0.0
        %2528 = vmatprep.subr.mxu0 0.0
        %2529 = vmatpush2.msra.mxu0 0.0
        %2530 = vmatprep.subr.mxu0 0.0
        %2531 = vmatpush2.msra.mxu0 0.0
        %2532 = vmatprep.subr.mxu0 0.0
        %2533 = vmatpush2.msra.mxu0 0.0
        %2534 = vmatprep.subr.mxu0 0.0
        %2535 = vmatpush2.msra.mxu0 0.0
        %2536 = vmatprep.subr.mxu0 0.0
        %2537 = vmatpush2.msra.mxu0 0.0
        %2538 = vmatprep.subr.mxu0 0.0
        %2539 = vmatpush2.msra.mxu0 0.0
        %2540 = vmatprep.subr.mxu0 0.0
        %2541 = vmatpush2.msra.mxu0 0.0
        %2542 = vmatprep.subr.mxu0 0.0
        %2543 = vmatpush2.msra.mxu0 0.0
        %2544 = vmatprep.subr.mxu0 0.0
        %2545 = vmatpush2.msra.mxu0 0.0
        %2546 = vmatprep.subr.mxu0 0.0
        %2547 = vmatpush2.msra.mxu0 0.0
        %2548 = vmatprep.subr.mxu0 0.0
        %2549 = vmatpush2.msra.mxu0 0.0
        %2550 = vmatprep.subr.mxu0 0.0
        %2551 = vmatpush2.msra.mxu0 0.0
        %2552 = vmatprep.subr.mxu0 0.0
        %2553 = vmatpush2.msra.mxu0 0.0
        %2554 = vmatprep.mubr.f32.mxu0 0.0
        %2555 = vmatmul.mubr.f32.gmra.mxu0 %v2482
        %v2556 = vpop.f32.mrf.mxu0
        %v2557 = vadd.f32 0.0, %v2556
        %v2558 = vpop.f32.mrf.mxu0
        %2559 = vmatprep.mubr.f32.mxu0 0.0
        %2560 = vmatmul.mubr.f32.gmra.mxu0 %v2485
        %v2561 = vpop.f32.mrf.mxu0
        %v2562 = vadd.f32 0.0, %v2561
        %v2563 = vpop.f32.mrf.mxu0
        %2564 = vdwg.mxu0
        %v2565 = vadd.f32 %v1885, %v1969
        %v2566 = vadd.f32 %v2565, %v2053
        %v2567 = vadd.f32 %v2566, %v2137
        %v2568 = vadd.f32 %v2567, %v2221
        %v2569 = vadd.f32 %v2568, %v2305
        %v2570 = vadd.f32 %v2569, %v2389
        %v2571 = vadd.f32 %v2570, %v2473
        %v2572 = vadd.f32 %v2571, %v2557
        %vm2573 = vcmask 1041408
        %v2574 = vsel %vm2573, %v1890, 0.0
        %v2575 = vsel %vm2573, %v1974, 0.0
        %v2576 = vadd.f32 %v2574, %v2575
        %v2577 = vsel %vm2573, %v2058, 0.0
        %v2578 = vadd.f32 %v2576, %v2577
        %v2579 = vsel %vm2573, %v2142, 0.0
        %v2580 = vadd.f32 %v2578, %v2579
        %v2581 = vsel %vm2573, %v2226, 0.0
        %v2582 = vadd.f32 %v2580, %v2581
        %v2583 = vsel %vm2573, %v2310, 0.0
        %v2584 = vadd.f32 %v2582, %v2583
        %v2585 = vsel %vm2573, %v2394, 0.0
        %v2586 = vadd.f32 %v2584, %v2585
        %v2587 = vsel %vm2573, %v2478, 0.0
        %v2588 = vadd.f32 %v2586, %v2587
        %v2589 = vsel %vm2573, %v2562, 0.0
        %v2590 = vadd.f32 %v2588, %v2589
        %v2591 = vadd.f32 %v1789, %v2572
        %v2592 = vadd.f32 %v1790, %v2590
        %2593 = vset.pattern.permute.xlu0 19
        %2594 = vperm.xlu0 %2593, %v1582
        %v2595 = vpop.permute.xlu0 %2594
        %2597 = vset.pattern.permute.xlu0 19
        %2598 = vperm.xlu0 %2597, %v1583
        %v2599 = vpop.permute.xlu0 %2598
        %v2601 = vmul.f32 %v2595, %v2591
        %v2602 = vmul.f32 %v2599, %v2592
        %v2603 = vsel %vm2573, %v2602, 0.0
        %v2604 = vadd.f32 %v2601, %v2603
        %v2605 = vrot.slane %v2604, 4
        %v2606 = vadd.f32 %v2604, %v2605
        %v2607 = vrot.slane %v2606, 2
        %v2608 = vadd.f32 %v2606, %v2607
        %v2609 = vrot.slane %v2608, 1
        %v2610 = vadd.f32 %v2608, %v2609
        %s2611 = sld [smem:[#allocation8 + $0x2d]]
        %v2612 = vstv %s2611
        %v2613 = vadd.f32 %v2610, %v2612
        %2614 = vst [vmem:[%s269] sm:$0x1] %v2613
        %s2615 = sand.u32 %s142, 1
        %s2616 = scalar_lea.sflag [#allocation4], %s2615
        %s2617 = sand.u32 %s142, 1
        %s2618 = scalar_lea.vmem [#allocation9], %s2617
        // Predicated region
        $region53: #{tpu_custom_call.1} parent=39 // pred_check
          %p2619 = pneg %p152
        $region54: #{tpu_custom_call.1} parent=39 // pred_check_branch
          %2621 = sbr.rel (%p2619) target = $region56
        $region55: #{tpu_custom_call.1} parent=39 // pred_region
          %s2623 = ssub.s32 16, 16
          %2624 = vsyncadd %s2616, %s2623
          %s2625 = smul.addr %s24, 16
          %s2626 = scalar_lea.hbm %s5, %s2625
          %s2628 = sshll.u32 %s2618, 4
          %s2629 = int_to_ptr.vmem [resolvable:$true] %s2628
          %2631 = dma.vmem_to_hbm [thread:$0]  %s2629, 16, %s2626, %s2616
        $region56: #{tpu_custom_call.1} parent=39 // pred_fallthru
          _
      $region40: #{tpu_custom_call.1} parent=5 // pred_fallthru
        _
      %p2632 = scmp.le.s32.totalorder 2, %s19
      // Predicated region
      $region57: #{tpu_custom_call.1} parent=5 // pred_check
        %p2633 = pneg %p2632
      $region58: #{tpu_custom_call.1} parent=5 // pred_check_branch
        %2635 = sbr.rel (%p2633) target = $region60
      $region59: #{tpu_custom_call.1} parent=5 // pred_region
        %s2636 = ssub.s32 %s19, 2
        // Predicated region
        $region61: #{tpu_custom_call.1} parent=59 // pred_check
          %p2637 = pneg %p158
        $region62: #{tpu_custom_call.1} parent=59 // pred_check_branch
          %2639 = sbr.rel (%p2637) target = $region64
        $region63: #{tpu_custom_call.1} parent=59 // pred_region
          %s2640 = sand.u32 %s143, 1
          %s2641 = scalar_lea.sflag [#allocation4], %s2640
          %s2642 = sand.u32 %s143, 1
          %s2643 = scalar_lea.vmem [#allocation9], %s2642
          %2644 = dma.done %s2641, 16
        $region64: #{tpu_custom_call.1} parent=59 // pred_fallthru
          _
      $region60: #{tpu_custom_call.1} parent=5 // pred_fallthru
        _
    $region6: #{tpu_custom_call.1} parent=1 // loop_footer
      %s23 = sadd.s32 1, %s19
    $region7: #{tpu_custom_call.1} parent=1 // loop_footer_branch
      %18 = sbr.rel target = $region3
    $region8: #{tpu_custom_call.1} parent=1 // loop_exit
      _
    %2645 = vsyncpa [#allocation3], 1
    %s2646 = scalar_lea.sflag [#allocation3], 1
    %2647 = vsyncpa %s2646, 1
    %2648 = vsyncpa [#allocation7], 1
    %2649 = vsyncpa [#allocation4], 1
    %s2650 = scalar_lea.sflag [#allocation4], 1
    %2651 = vsyncpa %s2650, 1
    %2652 = vsyncpa [#allocation5], 1
    %s2653 = scalar_lea.sflag [#allocation5], 1
    %2654 = vsyncpa %s2653, 1

</llo_original>
